<compile_context>
chip_gen: v7x
topology: tpu7x:2x2x1
jax: 0.10.0
libtpu: 0.0.40
codegen_flags: <defaults>
</compile_context>

<pallas_src>
import jax
import jax.numpy as jnp
from jax.experimental import pallas as pl
from jax.experimental.pallas import tpu as pltpu


def _make_wavefront_rnn_kernel(num_layers, seq_len, batch, hidden, in_dim):
    """Builds the fused wavefront kernel with static L/T/B/H/D (fully unrolled)."""
    L, T, B, H, D = num_layers, seq_len, batch, hidden, in_dim
    LH = L * H
    S_TOT = L + T - 1  # number of wavefront (anti-diagonal) steps

    def kernel(x_ref, wcomb_ref, w0pad_ref, bsteps_ref, hlast_ref):
        # x_ref:      (B, T*D)       batch-major flattened input (free reshape)
        # wcomb_ref:  (L*H, L*H)     block-diag W_hh^T + block-superdiag W_ih^T
        # w0pad_ref:  (D, L*H)       W_ih[0]^T placed in lane block 0, zeros elsewhere
        # bsteps_ref: (L+T-1, 1, LH) per-step folded bias, masked so not-yet-active
        #                            layers stay exactly zero
        # hlast_ref:  (B, H)         OUTPUT: final hidden state of the last layer
        w_comb = wcomb_ref[...]
        w0pad = w0pad_ref[...]
        x2 = x_ref[...]

        # Packed state: lane block l holds h_l at time t = s - l (zero if inactive).
        state = jnp.zeros((B, LH), jnp.float32)

        for s in range(S_TOT):                 # static: fully unrolled, 15 steps
            add = bsteps_ref[s]                # (1, LH) masked folded bias
            if s < T:
                # Layer-0 input injection for time t = s.  Independent of `state`
                # => off the serial critical path (scheduler hides it under the
                # recurrence latency).  Lands directly in lane block 0.
                x_s = x2[:, s * D:(s + 1) * D]                       # (B, D)
                add = add + jnp.dot(x_s, w0pad,
                                    preferred_element_type=jnp.float32)  # (B, LH)
            if s == 0:
                # Initial state is all zeros: skip the matmul against zeros.
                state = jnp.tanh(add * jnp.ones((B, LH), jnp.float32))
            else:
                # ONE matmul computes, for every layer l simultaneously:
                #   h_l(prev) @ W_hh[l]^T  +  h_{l-1}(prev) @ W_ih[l]^T
                state = jnp.tanh(
                    jnp.dot(state, w_comb, preferred_element_type=jnp.float32)
                    + add)

        # Only the last layer's final hidden state ever leaves VMEM.
        hlast_ref[...] = state[:, (L - 1) * H:]

    return kernel


def init_params(key, input_size, hidden_size, num_layers):
    """Deterministic PyTorch-style init: U(-1/sqrt(H), 1/sqrt(H))."""
    k = 1.0 / jnp.sqrt(jnp.float32(hidden_size))
    params = []
    for layer in range(num_layers):
        d_in = input_size if layer == 0 else hidden_size
        key, k1, k2, k3, k4 = jax.random.split(key, 5)
        w_ih = jax.random.uniform(k1, (hidden_size, d_in), jnp.float32, -k, k)
        w_hh = jax.random.uniform(k2, (hidden_size, hidden_size), jnp.float32, -k, k)
        b_ih = jax.random.uniform(k3, (hidden_size,), jnp.float32, -k, k)
        b_hh = jax.random.uniform(k4, (hidden_size,), jnp.float32, -k, k)
        params.append((w_ih, w_hh, b_ih, b_hh))
    return params


def prepare_params(params, seq_len):
    """One-time parameter prep (hoisted out of the forward pass).

    Returns:
      w_comb     (L*H, L*H): W_hh[l]^T on block-diagonal (l,l) and W_ih[l]^T on
                 block (l-1, l), so one packed matmul does recurrent + layer
                 coupling for every layer at once.
      w0pad      (D, L*H):   W_ih[0]^T in lane block 0 (layer-0 input path).
      bias_steps (L+T-1, 1, L*H): folded bias (b_ih+b_hh) per layer, zero-masked
                 for layers that have not started at wavefront step s (this keeps
                 inactive state blocks exactly zero with no on-chain masking).
    """
    L = len(params)
    H = params[0][1].shape[0]
    D = params[0][0].shape[1]
    LH = L * H

    w_comb = jnp.zeros((LH, LH), jnp.float32)
    for l, (w_ih, w_hh, _, _) in enumerate(params):
        w_comb = w_comb.at[l * H:(l + 1) * H, l * H:(l + 1) * H].set(
            w_hh.T.astype(jnp.float32))
        if l > 0:
            w_comb = w_comb.at[(l - 1) * H:l * H, l * H:(l + 1) * H].set(
                w_ih.T.astype(jnp.float32))

    w0pad = jnp.zeros((D, LH), jnp.float32)
    w0pad = w0pad.at[:, :H].set(params[0][0].T.astype(jnp.float32))

    bias = jnp.concatenate([(b_ih + b_hh).astype(jnp.float32)
                            for (_, _, b_ih, b_hh) in params]).reshape(1, LH)
    s_tot = L + seq_len - 1
    block_idx = jnp.arange(LH) // H                              # (LH,)
    active = (block_idx[None, :] <= jnp.arange(s_tot)[:, None])  # (s_tot, LH)
    bias_steps = (active.astype(jnp.float32) * bias).reshape(s_tot, 1, LH)
    return w_comb, w0pad, bias_steps


@jax.jit
def model_forward(x, w_comb, w0pad, bias_steps):
    """x: (B, T, input_size) batch-first, like nn.RNN(batch_first=True).
    Returns hid[-1].flatten() -> (B * hidden_size,)."""
    B, T, D = x.shape
    LH = w_comb.shape[0]
    L = bias_steps.shape[0] - T + 1
    H = LH // L

    # Free, contiguous reshape (no transpose / no extra layout op): the kernel
    # extracts per-timestep slabs with static lane slices.
    x2 = x.astype(jnp.float32).reshape(B, T * D)

    kernel = _make_wavefront_rnn_kernel(L, T, B, H, D)
    h_last = pl.pallas_call(
        kernel,
        out_shape=jax.ShapeDtypeStruct((B, H), jnp.float32),
        # No grid: the whole problem (~20 KB of weights + activations) lives in
        # VMEM for the duration of one kernel invocation on one TensorCore.
        in_specs=[pl.BlockSpec(memory_space=pltpu.MemorySpace.VMEM)] * 4,
        out_specs=pl.BlockSpec(memory_space=pltpu.MemorySpace.VMEM),
    )(x2, w_comb, w0pad, bias_steps)
    return h_last.reshape(-1)


def reference_forward(x, params):
    """Pure-JAX reference matching torch.nn.RNN (tanh, batch_first)."""
    B, T, _ = x.shape
    h_seq = x.astype(jnp.float32)
    last = None
    for (w_ih, w_hh, b_ih, b_hh) in params:
        H = w_hh.shape[0]
        h = jnp.zeros((B, H), jnp.float32)
        outs = []
        for t in range(T):
            h = jnp.tanh(h_seq[:, t, :] @ w_ih.T + b_ih + h @ w_hh.T + b_hh)
            outs.append(h)
        h_seq = jnp.stack(outs, axis=1)
        last = h
    return last.reshape(-1)


if __name__ == "__main__":
    # Shapes chosen so the original module's h0 buffer shape is consistent:
    # input_size == neurons (num_layers) == hidden_size == batch == 8.
    INPUT_SIZE = 8
    HIDDEN_SIZE = 8
    NEURONS = 8        # num_layers
    BATCH = 8
    SEQ = 8

    key = jax.random.PRNGKey(0)
    kx, kp = jax.random.split(key)
    x = jax.random.normal(kx, (BATCH, SEQ, INPUT_SIZE), jnp.float32)
    params = init_params(kp, INPUT_SIZE, HIDDEN_SIZE, NEURONS)
    w_comb, w0pad, bias_steps = prepare_params(params, SEQ)   # one-time prep

    out = model_forward(x, w_comb, w0pad, bias_steps)
    out = jax.block_until_ready(out)

    ref = reference_forward(x, params)
    assert out.shape == (BATCH * HIDDEN_SIZE,), out.shape
    assert jnp.allclose(out, ref, atol=3e-5, rtol=3e-5), (
        f"max abs err {jnp.max(jnp.abs(out - ref))}")

    print("KERNEL_OK")
</pallas_src>

<mosaic_0001>
module attributes {stable_mosaic.version = 11 : i64} {
  func.func @kernel(%arg0: memref<8x64xf32, #tpu.memory_space<vmem>>, %arg1: memref<64x64xf32, #tpu.memory_space<vmem>>, %arg2: memref<8x64xf32, #tpu.memory_space<vmem>>, %arg3: memref<15x1x64xf32, #tpu.memory_space<vmem>>, %arg4: memref<8x8xf32, #tpu.memory_space<vmem>>) attributes {dimension_semantics = [], scalar_prefetch = 0 : i64, scratch_operands = 0 : i64, tpu.core_type = #tpu.core_type<tc>} {
    %c0 = arith.constant 0 : index
    %c0_0 = arith.constant 0 : index
    %0 = vector.load %arg1[%c0, %c0_0] : memref<64x64xf32, #tpu.memory_space<vmem>>, vector<64x64xf32>
    %c0_1 = arith.constant 0 : index
    %c0_2 = arith.constant 0 : index
    %1 = vector.load %arg2[%c0_1, %c0_2] : memref<8x64xf32, #tpu.memory_space<vmem>>, vector<8x64xf32>
    %c0_3 = arith.constant 0 : index
    %c0_4 = arith.constant 0 : index
    %2 = vector.load %arg0[%c0_3, %c0_4] : memref<8x64xf32, #tpu.memory_space<vmem>>, vector<8x64xf32>
    %c0_5 = arith.constant 0 : index
    %c0_6 = arith.constant 0 : index
    %c0_7 = arith.constant 0 : index
    %3 = vector.load %arg3[%c0_5, %c0_6, %c0_7] : memref<15x1x64xf32, #tpu.memory_space<vmem>>, vector<1x1x64xf32>
    %4 = vector.shape_cast %3 : vector<1x1x64xf32> to vector<1x64xf32>
    %5 = vector.extract_strided_slice %2 {offsets = [0, 0], sizes = [8, 8], strides = [1, 1]} : vector<8x64xf32> to vector<8x8xf32>
    %cst = arith.constant dense<0.000000e+00> : vector<8x64xf32>
    %6 = tpu.matmul %5, %1, %cst {dimension_numbers = #tpu.dot_dimension_numbers<[1], [0], [0], [1], [0, 0, 1, 1], [], []>} : vector<8x8xf32>, vector<8x64xf32>, vector<8x64xf32> -> vector<8x64xf32>
    %7 = vector.broadcast %4 : vector<1x64xf32> to vector<8x64xf32>
    %8 = arith.addf %7, %6 : vector<8x64xf32>
    %cst_8 = arith.constant 1.000000e+00 : f32
    %9 = vector.broadcast %cst_8 : f32 to vector<8x64xf32>
    %10 = arith.mulf %8, %9 : vector<8x64xf32>
    %11 = math.tanh %10 : vector<8x64xf32>
    %c1 = arith.constant 1 : index
    %c0_9 = arith.constant 0 : index
    %c0_10 = arith.constant 0 : index
    %12 = vector.load %arg3[%c1, %c0_9, %c0_10] : memref<15x1x64xf32, #tpu.memory_space<vmem>>, vector<1x1x64xf32>
    %13 = vector.shape_cast %12 : vector<1x1x64xf32> to vector<1x64xf32>
    %14 = vector.extract_strided_slice %2 {offsets = [0, 8], sizes = [8, 8], strides = [1, 1]} : vector<8x64xf32> to vector<8x8xf32>
    %cst_11 = arith.constant dense<0.000000e+00> : vector<8x64xf32>
    %15 = tpu.matmul %14, %1, %cst_11 {dimension_numbers = #tpu.dot_dimension_numbers<[1], [0], [0], [1], [0, 0, 1, 1], [], []>} : vector<8x8xf32>, vector<8x64xf32>, vector<8x64xf32> -> vector<8x64xf32>
    %16 = vector.broadcast %13 : vector<1x64xf32> to vector<8x64xf32>
    %17 = arith.addf %16, %15 : vector<8x64xf32>
    %cst_12 = arith.constant dense<0.000000e+00> : vector<8x64xf32>
    %18 = tpu.matmul %11, %0, %cst_12 {dimension_numbers = #tpu.dot_dimension_numbers<[1], [0], [0], [1], [0, 0, 1, 1], [], []>} : vector<8x64xf32>, vector<64x64xf32>, vector<8x64xf32> -> vector<8x64xf32>
    %19 = arith.addf %18, %17 : vector<8x64xf32>
    %20 = math.tanh %19 : vector<8x64xf32>
    %c2 = arith.constant 2 : index
    %c0_13 = arith.constant 0 : index
    %c0_14 = arith.constant 0 : index
    %21 = vector.load %arg3[%c2, %c0_13, %c0_14] : memref<15x1x64xf32, #tpu.memory_space<vmem>>, vector<1x1x64xf32>
    %22 = vector.shape_cast %21 : vector<1x1x64xf32> to vector<1x64xf32>
    %23 = vector.extract_strided_slice %2 {offsets = [0, 16], sizes = [8, 8], strides = [1, 1]} : vector<8x64xf32> to vector<8x8xf32>
    %cst_15 = arith.constant dense<0.000000e+00> : vector<8x64xf32>
    %24 = tpu.matmul %23, %1, %cst_15 {dimension_numbers = #tpu.dot_dimension_numbers<[1], [0], [0], [1], [0, 0, 1, 1], [], []>} : vector<8x8xf32>, vector<8x64xf32>, vector<8x64xf32> -> vector<8x64xf32>
    %25 = vector.broadcast %22 : vector<1x64xf32> to vector<8x64xf32>
    %26 = arith.addf %25, %24 : vector<8x64xf32>
    %cst_16 = arith.constant dense<0.000000e+00> : vector<8x64xf32>
    %27 = tpu.matmul %20, %0, %cst_16 {dimension_numbers = #tpu.dot_dimension_numbers<[1], [0], [0], [1], [0, 0, 1, 1], [], []>} : vector<8x64xf32>, vector<64x64xf32>, vector<8x64xf32> -> vector<8x64xf32>
    %28 = arith.addf %27, %26 : vector<8x64xf32>
    %29 = math.tanh %28 : vector<8x64xf32>
    %c3 = arith.constant 3 : index
    %c0_17 = arith.constant 0 : index
    %c0_18 = arith.constant 0 : index
    %30 = vector.load %arg3[%c3, %c0_17, %c0_18] : memref<15x1x64xf32, #tpu.memory_space<vmem>>, vector<1x1x64xf32>
    %31 = vector.shape_cast %30 : vector<1x1x64xf32> to vector<1x64xf32>
    %32 = vector.extract_strided_slice %2 {offsets = [0, 24], sizes = [8, 8], strides = [1, 1]} : vector<8x64xf32> to vector<8x8xf32>
    %cst_19 = arith.constant dense<0.000000e+00> : vector<8x64xf32>
    %33 = tpu.matmul %32, %1, %cst_19 {dimension_numbers = #tpu.dot_dimension_numbers<[1], [0], [0], [1], [0, 0, 1, 1], [], []>} : vector<8x8xf32>, vector<8x64xf32>, vector<8x64xf32> -> vector<8x64xf32>
    %34 = vector.broadcast %31 : vector<1x64xf32> to vector<8x64xf32>
    %35 = arith.addf %34, %33 : vector<8x64xf32>
    %cst_20 = arith.constant dense<0.000000e+00> : vector<8x64xf32>
    %36 = tpu.matmul %29, %0, %cst_20 {dimension_numbers = #tpu.dot_dimension_numbers<[1], [0], [0], [1], [0, 0, 1, 1], [], []>} : vector<8x64xf32>, vector<64x64xf32>, vector<8x64xf32> -> vector<8x64xf32>
    %37 = arith.addf %36, %35 : vector<8x64xf32>
    %38 = math.tanh %37 : vector<8x64xf32>
    %c4 = arith.constant 4 : index
    %c0_21 = arith.constant 0 : index
    %c0_22 = arith.constant 0 : index
    %39 = vector.load %arg3[%c4, %c0_21, %c0_22] : memref<15x1x64xf32, #tpu.memory_space<vmem>>, vector<1x1x64xf32>
    %40 = vector.shape_cast %39 : vector<1x1x64xf32> to vector<1x64xf32>
    %41 = vector.extract_strided_slice %2 {offsets = [0, 32], sizes = [8, 8], strides = [1, 1]} : vector<8x64xf32> to vector<8x8xf32>
    %cst_23 = arith.constant dense<0.000000e+00> : vector<8x64xf32>
    %42 = tpu.matmul %41, %1, %cst_23 {dimension_numbers = #tpu.dot_dimension_numbers<[1], [0], [0], [1], [0, 0, 1, 1], [], []>} : vector<8x8xf32>, vector<8x64xf32>, vector<8x64xf32> -> vector<8x64xf32>
    %43 = vector.broadcast %40 : vector<1x64xf32> to vector<8x64xf32>
    %44 = arith.addf %43, %42 : vector<8x64xf32>
    %cst_24 = arith.constant dense<0.000000e+00> : vector<8x64xf32>
    %45 = tpu.matmul %38, %0, %cst_24 {dimension_numbers = #tpu.dot_dimension_numbers<[1], [0], [0], [1], [0, 0, 1, 1], [], []>} : vector<8x64xf32>, vector<64x64xf32>, vector<8x64xf32> -> vector<8x64xf32>
    %46 = arith.addf %45, %44 : vector<8x64xf32>
    %47 = math.tanh %46 : vector<8x64xf32>
    %c5 = arith.constant 5 : index
    %c0_25 = arith.constant 0 : index
    %c0_26 = arith.constant 0 : index
    %48 = vector.load %arg3[%c5, %c0_25, %c0_26] : memref<15x1x64xf32, #tpu.memory_space<vmem>>, vector<1x1x64xf32>
    %49 = vector.shape_cast %48 : vector<1x1x64xf32> to vector<1x64xf32>
    %50 = vector.extract_strided_slice %2 {offsets = [0, 40], sizes = [8, 8], strides = [1, 1]} : vector<8x64xf32> to vector<8x8xf32>
    %cst_27 = arith.constant dense<0.000000e+00> : vector<8x64xf32>
    %51 = tpu.matmul %50, %1, %cst_27 {dimension_numbers = #tpu.dot_dimension_numbers<[1], [0], [0], [1], [0, 0, 1, 1], [], []>} : vector<8x8xf32>, vector<8x64xf32>, vector<8x64xf32> -> vector<8x64xf32>
    %52 = vector.broadcast %49 : vector<1x64xf32> to vector<8x64xf32>
    %53 = arith.addf %52, %51 : vector<8x64xf32>
    %cst_28 = arith.constant dense<0.000000e+00> : vector<8x64xf32>
    %54 = tpu.matmul %47, %0, %cst_28 {dimension_numbers = #tpu.dot_dimension_numbers<[1], [0], [0], [1], [0, 0, 1, 1], [], []>} : vector<8x64xf32>, vector<64x64xf32>, vector<8x64xf32> -> vector<8x64xf32>
    %55 = arith.addf %54, %53 : vector<8x64xf32>
    %56 = math.tanh %55 : vector<8x64xf32>
    %c6 = arith.constant 6 : index
    %c0_29 = arith.constant 0 : index
    %c0_30 = arith.constant 0 : index
    %57 = vector.load %arg3[%c6, %c0_29, %c0_30] : memref<15x1x64xf32, #tpu.memory_space<vmem>>, vector<1x1x64xf32>
    %58 = vector.shape_cast %57 : vector<1x1x64xf32> to vector<1x64xf32>
    %59 = vector.extract_strided_slice %2 {offsets = [0, 48], sizes = [8, 8], strides = [1, 1]} : vector<8x64xf32> to vector<8x8xf32>
    %cst_31 = arith.constant dense<0.000000e+00> : vector<8x64xf32>
    %60 = tpu.matmul %59, %1, %cst_31 {dimension_numbers = #tpu.dot_dimension_numbers<[1], [0], [0], [1], [0, 0, 1, 1], [], []>} : vector<8x8xf32>, vector<8x64xf32>, vector<8x64xf32> -> vector<8x64xf32>
    %61 = vector.broadcast %58 : vector<1x64xf32> to vector<8x64xf32>
    %62 = arith.addf %61, %60 : vector<8x64xf32>
    %cst_32 = arith.constant dense<0.000000e+00> : vector<8x64xf32>
    %63 = tpu.matmul %56, %0, %cst_32 {dimension_numbers = #tpu.dot_dimension_numbers<[1], [0], [0], [1], [0, 0, 1, 1], [], []>} : vector<8x64xf32>, vector<64x64xf32>, vector<8x64xf32> -> vector<8x64xf32>
    %64 = arith.addf %63, %62 : vector<8x64xf32>
    %65 = math.tanh %64 : vector<8x64xf32>
    %c7 = arith.constant 7 : index
    %c0_33 = arith.constant 0 : index
    %c0_34 = arith.constant 0 : index
    %66 = vector.load %arg3[%c7, %c0_33, %c0_34] : memref<15x1x64xf32, #tpu.memory_space<vmem>>, vector<1x1x64xf32>
    %67 = vector.shape_cast %66 : vector<1x1x64xf32> to vector<1x64xf32>
    %68 = vector.extract_strided_slice %2 {offsets = [0, 56], sizes = [8, 8], strides = [1, 1]} : vector<8x64xf32> to vector<8x8xf32>
    %cst_35 = arith.constant dense<0.000000e+00> : vector<8x64xf32>
    %69 = tpu.matmul %68, %1, %cst_35 {dimension_numbers = #tpu.dot_dimension_numbers<[1], [0], [0], [1], [0, 0, 1, 1], [], []>} : vector<8x8xf32>, vector<8x64xf32>, vector<8x64xf32> -> vector<8x64xf32>
    %70 = vector.broadcast %67 : vector<1x64xf32> to vector<8x64xf32>
    %71 = arith.addf %70, %69 : vector<8x64xf32>
    %cst_36 = arith.constant dense<0.000000e+00> : vector<8x64xf32>
    %72 = tpu.matmul %65, %0, %cst_36 {dimension_numbers = #tpu.dot_dimension_numbers<[1], [0], [0], [1], [0, 0, 1, 1], [], []>} : vector<8x64xf32>, vector<64x64xf32>, vector<8x64xf32> -> vector<8x64xf32>
    %73 = arith.addf %72, %71 : vector<8x64xf32>
    %74 = math.tanh %73 : vector<8x64xf32>
    %c8 = arith.constant 8 : index
    %c0_37 = arith.constant 0 : index
    %c0_38 = arith.constant 0 : index
    %75 = vector.load %arg3[%c8, %c0_37, %c0_38] : memref<15x1x64xf32, #tpu.memory_space<vmem>>, vector<1x1x64xf32>
    %76 = vector.shape_cast %75 : vector<1x1x64xf32> to vector<1x64xf32>
    %cst_39 = arith.constant dense<0.000000e+00> : vector<8x64xf32>
    %77 = tpu.matmul %74, %0, %cst_39 {dimension_numbers = #tpu.dot_dimension_numbers<[1], [0], [0], [1], [0, 0, 1, 1], [], []>} : vector<8x64xf32>, vector<64x64xf32>, vector<8x64xf32> -> vector<8x64xf32>
    %78 = vector.broadcast %76 : vector<1x64xf32> to vector<8x64xf32>
    %79 = arith.addf %77, %78 : vector<8x64xf32>
    %80 = math.tanh %79 : vector<8x64xf32>
    %c9 = arith.constant 9 : index
    %c0_40 = arith.constant 0 : index
    %c0_41 = arith.constant 0 : index
    %81 = vector.load %arg3[%c9, %c0_40, %c0_41] : memref<15x1x64xf32, #tpu.memory_space<vmem>>, vector<1x1x64xf32>
    %82 = vector.shape_cast %81 : vector<1x1x64xf32> to vector<1x64xf32>
    %cst_42 = arith.constant dense<0.000000e+00> : vector<8x64xf32>
    %83 = tpu.matmul %80, %0, %cst_42 {dimension_numbers = #tpu.dot_dimension_numbers<[1], [0], [0], [1], [0, 0, 1, 1], [], []>} : vector<8x64xf32>, vector<64x64xf32>, vector<8x64xf32> -> vector<8x64xf32>
    %84 = vector.broadcast %82 : vector<1x64xf32> to vector<8x64xf32>
    %85 = arith.addf %83, %84 : vector<8x64xf32>
    %86 = math.tanh %85 : vector<8x64xf32>
    %c10 = arith.constant 10 : index
    %c0_43 = arith.constant 0 : index
    %c0_44 = arith.constant 0 : index
    %87 = vector.load %arg3[%c10, %c0_43, %c0_44] : memref<15x1x64xf32, #tpu.memory_space<vmem>>, vector<1x1x64xf32>
    %88 = vector.shape_cast %87 : vector<1x1x64xf32> to vector<1x64xf32>
    %cst_45 = arith.constant dense<0.000000e+00> : vector<8x64xf32>
    %89 = tpu.matmul %86, %0, %cst_45 {dimension_numbers = #tpu.dot_dimension_numbers<[1], [0], [0], [1], [0, 0, 1, 1], [], []>} : vector<8x64xf32>, vector<64x64xf32>, vector<8x64xf32> -> vector<8x64xf32>
    %90 = vector.broadcast %88 : vector<1x64xf32> to vector<8x64xf32>
    %91 = arith.addf %89, %90 : vector<8x64xf32>
    %92 = math.tanh %91 : vector<8x64xf32>
    %c11 = arith.constant 11 : index
    %c0_46 = arith.constant 0 : index
    %c0_47 = arith.constant 0 : index
    %93 = vector.load %arg3[%c11, %c0_46, %c0_47] : memref<15x1x64xf32, #tpu.memory_space<vmem>>, vector<1x1x64xf32>
    %94 = vector.shape_cast %93 : vector<1x1x64xf32> to vector<1x64xf32>
    %cst_48 = arith.constant dense<0.000000e+00> : vector<8x64xf32>
    %95 = tpu.matmul %92, %0, %cst_48 {dimension_numbers = #tpu.dot_dimension_numbers<[1], [0], [0], [1], [0, 0, 1, 1], [], []>} : vector<8x64xf32>, vector<64x64xf32>, vector<8x64xf32> -> vector<8x64xf32>
    %96 = vector.broadcast %94 : vector<1x64xf32> to vector<8x64xf32>
    %97 = arith.addf %95, %96 : vector<8x64xf32>
    %98 = math.tanh %97 : vector<8x64xf32>
    %c12 = arith.constant 12 : index
    %c0_49 = arith.constant 0 : index
    %c0_50 = arith.constant 0 : index
    %99 = vector.load %arg3[%c12, %c0_49, %c0_50] : memref<15x1x64xf32, #tpu.memory_space<vmem>>, vector<1x1x64xf32>
    %100 = vector.shape_cast %99 : vector<1x1x64xf32> to vector<1x64xf32>
    %cst_51 = arith.constant dense<0.000000e+00> : vector<8x64xf32>
    %101 = tpu.matmul %98, %0, %cst_51 {dimension_numbers = #tpu.dot_dimension_numbers<[1], [0], [0], [1], [0, 0, 1, 1], [], []>} : vector<8x64xf32>, vector<64x64xf32>, vector<8x64xf32> -> vector<8x64xf32>
    %102 = vector.broadcast %100 : vector<1x64xf32> to vector<8x64xf32>
    %103 = arith.addf %101, %102 : vector<8x64xf32>
    %104 = math.tanh %103 : vector<8x64xf32>
    %c13 = arith.constant 13 : index
    %c0_52 = arith.constant 0 : index
    %c0_53 = arith.constant 0 : index
    %105 = vector.load %arg3[%c13, %c0_52, %c0_53] : memref<15x1x64xf32, #tpu.memory_space<vmem>>, vector<1x1x64xf32>
    %106 = vector.shape_cast %105 : vector<1x1x64xf32> to vector<1x64xf32>
    %cst_54 = arith.constant dense<0.000000e+00> : vector<8x64xf32>
    %107 = tpu.matmul %104, %0, %cst_54 {dimension_numbers = #tpu.dot_dimension_numbers<[1], [0], [0], [1], [0, 0, 1, 1], [], []>} : vector<8x64xf32>, vector<64x64xf32>, vector<8x64xf32> -> vector<8x64xf32>
    %108 = vector.broadcast %106 : vector<1x64xf32> to vector<8x64xf32>
    %109 = arith.addf %107, %108 : vector<8x64xf32>
    %110 = math.tanh %109 : vector<8x64xf32>
    %c14 = arith.constant 14 : index
    %c0_55 = arith.constant 0 : index
    %c0_56 = arith.constant 0 : index
    %111 = vector.load %arg3[%c14, %c0_55, %c0_56] : memref<15x1x64xf32, #tpu.memory_space<vmem>>, vector<1x1x64xf32>
    %112 = vector.shape_cast %111 : vector<1x1x64xf32> to vector<1x64xf32>
    %cst_57 = arith.constant dense<0.000000e+00> : vector<8x64xf32>
    %113 = tpu.matmul %110, %0, %cst_57 {dimension_numbers = #tpu.dot_dimension_numbers<[1], [0], [0], [1], [0, 0, 1, 1], [], []>} : vector<8x64xf32>, vector<64x64xf32>, vector<8x64xf32> -> vector<8x64xf32>
    %114 = vector.broadcast %112 : vector<1x64xf32> to vector<8x64xf32>
    %115 = arith.addf %113, %114 : vector<8x64xf32>
    %116 = math.tanh %115 : vector<8x64xf32>
    %117 = vector.extract_strided_slice %116 {offsets = [0, 56], sizes = [8, 8], strides = [1, 1]} : vector<8x64xf32> to vector<8x8xf32>
    %c0_58 = arith.constant 0 : index
    %c0_59 = arith.constant 0 : index
    %118 = vector.load %arg4[%c0_58, %c0_59] : memref<8x8xf32, #tpu.memory_space<vmem>>, vector<8x8xf32>
    tpu.vector_store %arg4[%c0_58, %c0_59], %117 {strides = array<i32>} : memref<8x8xf32, #tpu.memory_space<vmem>>, vector<8x8xf32>,
    return
  }
}

</mosaic_0001>

<llo_original>
// kernel: model_forward.1
$region0: #{model_forward.1}
  #allocation0 [shape = 'u32[]', space=smem, size = 0x4, offset = 0x4, fixed_abs, tag = 'smem constant byte address 0x4 - core index']
  #allocation1 [shape = 'u32[144,128]{1,0:T(1,128)}', space=vmem, size = 0x12000, scoped, tag = 'internal scratch']
  %s0 = inlined_call_operand.vmem [shape: f32[8,64], index: 0, kind: input, shape index: {}]
  %s1 = inlined_call_operand.vmem [shape: f32[64,64], index: 1, kind: input, shape index: {}]
  %s2 = inlined_call_operand.hbm [shape: f32[8,64], index: 2, kind: input, shape index: {}]
  %s3 = inlined_call_operand.vmem [shape: f32[15,1,64], index: 3, kind: input, shape index: {}]
  %s4 = inlined_call_operand.vmem [shape: f32[8,8], index: 4, kind: output, shape index: {}]
  %s5 = sld [smem:[#allocation0]]
  $region30: #{model_forward.1} parent=0
    _
  %s7 = ssub.s32 1, %s5
  %s8 = scalar_select 0, %s7, %s5
  $region1: #{model_forward.1} parent=0
    #allocation2 [shape = 'u8[4096]{0}', space=vmem, size = 0x1000, scoped, tag = 'input window, operand 2, single buffered']
    #allocation3 [shape = 's32[1]{0}', space=sflag, size = 0x4, scoped, tag = 'scoped memory for model_forward.1']
    %9 = vsyncpa [#allocation3], 0
    // Predicated region
    $region2: #{model_forward.1} parent=1 // pred_check
      _
    $region3: #{model_forward.1} parent=1 // pred_check_branch
      %11 = sbr.rel (0) target = $region5
    $region4: #{model_forward.1} parent=1 // pred_region
      _
    $region5: #{model_forward.1} parent=1 // pred_fallthru
      _
    // Predicated region
    $region6: #{model_forward.1} parent=1 // pred_check
      _
    $region7: #{model_forward.1} parent=1 // pred_check_branch
      %13 = sbr.rel (0) target = $region9
    $region8: #{model_forward.1} parent=1 // pred_region
      _
    $region9: #{model_forward.1} parent=1 // pred_fallthru
      _
    // Predicated region
    $region10: #{model_forward.1} parent=1 // pred_check
      _
    $region11: #{model_forward.1} parent=1 // pred_check_branch
      %15 = sbr.rel (0) target = $region13
    $region12: #{model_forward.1} parent=1 // pred_region
      %s17 = ssub.s32 128, 128
      %18 = vsyncadd [#allocation3], %s17
      %s20 = sshll.u32 [#allocation2], 4
      %s21 = int_to_ptr.vmem [resolvable:$true] %s20
      %23 = dma.hbm_to_vmem [thread:$0]  %s2, 128, %s21, [#allocation3]
    $region13: #{model_forward.1} parent=1 // pred_fallthru
      _
    // Predicated region
    $region14: #{model_forward.1} parent=1 // pred_check
      _
    $region15: #{model_forward.1} parent=1 // pred_check_branch
      %25 = sbr.rel (0) target = $region17
    $region16: #{model_forward.1} parent=1 // pred_region
      _
    $region17: #{model_forward.1} parent=1 // pred_fallthru
      _
    // Predicated region
    $region18: #{model_forward.1} parent=1 // pred_check
      _
    $region19: #{model_forward.1} parent=1 // pred_check_branch
      %27 = sbr.rel (0) target = $region21
    $region20: #{model_forward.1} parent=1 // pred_region
      %28 = dma.done [#allocation3], 128
    $region21: #{model_forward.1} parent=1 // pred_fallthru
      _
    %v29 = vld [vmem:[%s1] sm:$0xff]
    %v30 = vld [vmem:[%s1 + $0x8] sm:$0xff]
    %v31 = vld [vmem:[%s1 + $0x10] sm:$0xff]
    %v32 = vld [vmem:[%s1 + $0x18] sm:$0xff]
    %v33 = vld [vmem:[%s1 + $0x20] sm:$0xff]
    %v34 = vld [vmem:[%s1 + $0x28] sm:$0xff]
    %v35 = vld [vmem:[%s1 + $0x30] sm:$0xff]
    %v36 = vld [vmem:[%s1 + $0x38] sm:$0xff]
    %v37 = vld [vmem:[#allocation2] sm:$0xff]
    %v38 = vld [vmem:[%s0] sm:$0xff]
    %v39 = vld [vmem:[%s3] sm:$0x1]
    %vm40 = vcmask 64512
    %v42 = vsel %vm40, %v38, 0
    %44 = vmatprep.subr.mxu0 0.0
    %45 = vmatpush1.msra.mxu0 %v37
    %46 = vmatprep.subr.mxu0 0.0
    %47 = vmatpush1.msra.mxu0 0.0
    %48 = vmatprep.subr.mxu0 0.0
    %49 = vmatpush1.msra.mxu0 0.0
    %50 = vmatprep.subr.mxu0 0.0
    %51 = vmatpush1.msra.mxu0 0.0
    %52 = vmatprep.subr.mxu0 0.0
    %53 = vmatpush1.msra.mxu0 0.0
    %54 = vmatprep.subr.mxu0 0.0
    %55 = vmatpush1.msra.mxu0 0.0
    %56 = vmatprep.subr.mxu0 0.0
    %57 = vmatpush1.msra.mxu0 0.0
    %58 = vmatprep.subr.mxu0 0.0
    %59 = vmatpush1.msra.mxu0 0.0
    %60 = vmatprep.subr.mxu0 0.0
    %61 = vmatpush1.msra.mxu0 0.0
    %62 = vmatprep.subr.mxu0 0.0
    %63 = vmatpush1.msra.mxu0 0.0
    %64 = vmatprep.subr.mxu0 0.0
    %65 = vmatpush1.msra.mxu0 0.0
    %66 = vmatprep.subr.mxu0 0.0
    %67 = vmatpush1.msra.mxu0 0.0
    %68 = vmatprep.subr.mxu0 0.0
    %69 = vmatpush1.msra.mxu0 0.0
    %70 = vmatprep.subr.mxu0 0.0
    %71 = vmatpush1.msra.mxu0 0.0
    %72 = vmatprep.subr.mxu0 0.0
    %73 = vmatpush1.msra.mxu0 0.0
    %74 = vmatprep.subr.mxu0 0.0
    %75 = vmatpush1.msra.mxu0 0.0
    %76 = vmatprep.subr.mxu0 0.0
    %77 = vmatpush1.msra.mxu0 0.0
    %78 = vmatprep.subr.mxu0 0.0
    %79 = vmatpush1.msra.mxu0 0.0
    %80 = vmatprep.subr.mxu0 0.0
    %81 = vmatpush1.msra.mxu0 0.0
    %82 = vmatprep.subr.mxu0 0.0
    %83 = vmatpush1.msra.mxu0 0.0
    %84 = vmatprep.subr.mxu0 0.0
    %85 = vmatpush1.msra.mxu0 0.0
    %86 = vmatprep.subr.mxu0 0.0
    %87 = vmatpush1.msra.mxu0 0.0
    %88 = vmatprep.subr.mxu0 0.0
    %89 = vmatpush1.msra.mxu0 0.0
    %90 = vmatprep.subr.mxu0 0.0
    %91 = vmatpush1.msra.mxu0 0.0
    %92 = vmatprep.subr.mxu0 0.0
    %93 = vmatpush1.msra.mxu0 0.0
    %94 = vmatprep.subr.mxu0 0.0
    %95 = vmatpush1.msra.mxu0 0.0
    %96 = vmatprep.subr.mxu0 0.0
    %97 = vmatpush1.msra.mxu0 0.0
    %98 = vmatprep.subr.mxu0 0.0
    %99 = vmatpush1.msra.mxu0 0.0
    %100 = vmatprep.subr.mxu0 0.0
    %101 = vmatpush1.msra.mxu0 0.0
    %102 = vmatprep.subr.mxu0 0.0
    %103 = vmatpush1.msra.mxu0 0.0
    %104 = vmatprep.subr.mxu0 0.0
    %105 = vmatpush1.msra.mxu0 0.0
    %106 = vmatprep.subr.mxu0 0.0
    %107 = vmatpush1.msra.mxu0 0.0
    %108 = vmatprep.mubr.f32.mxu0 0.0
    %109 = vmatmul.mubr.f32.gmra.mrb[0].mxu0 %v42
    %v110 = vpop.f32.mrb[0].mxu0
    %v111 = vadd.f32 0.0, %v110
    %v112 = vpop.f32.mrb[0].mxu0
    %113 = vdwg.mxu0
    %v115 = vlaneseq
    %v116 = vshrl.u32 %v115, 7
    %v117 = vsub.s32 0, %v116
    %v118 = vrot.slane %v39, %v117
    %v120 = vadd.f32 %v118, %v111
    %v121 = vtanh.pop %v120
    %s122 = scalar_lea.vmem %s3, 1
    %v123 = vld [vmem:[%s122] sm:$0x1]
    %124 = vrot.lane.b32.xlu0 %v38, 120
    %v125 = vpop.permute.xlu0 %124
    %v126 = vsel %vm40, %v125, 0
    %128 = vmatprep.subr.mxu0 0.0
    %129 = vmatpush1.msra.mxu0 %v37
    %130 = vmatprep.subr.mxu0 0.0
    %131 = vmatpush1.msra.mxu0 0.0
    %132 = vmatprep.subr.mxu0 0.0
    %133 = vmatpush1.msra.mxu0 0.0
    %134 = vmatprep.subr.mxu0 0.0
    %135 = vmatpush1.msra.mxu0 0.0
    %136 = vmatprep.subr.mxu0 0.0
    %137 = vmatpush1.msra.mxu0 0.0
    %138 = vmatprep.subr.mxu0 0.0
    %139 = vmatpush1.msra.mxu0 0.0
    %140 = vmatprep.subr.mxu0 0.0
    %141 = vmatpush1.msra.mxu0 0.0
    %142 = vmatprep.subr.mxu0 0.0
    %143 = vmatpush1.msra.mxu0 0.0
    %144 = vmatprep.subr.mxu0 0.0
    %145 = vmatpush1.msra.mxu0 0.0
    %146 = vmatprep.subr.mxu0 0.0
    %147 = vmatpush1.msra.mxu0 0.0
    %148 = vmatprep.subr.mxu0 0.0
    %149 = vmatpush1.msra.mxu0 0.0
    %150 = vmatprep.subr.mxu0 0.0
    %151 = vmatpush1.msra.mxu0 0.0
    %152 = vmatprep.subr.mxu0 0.0
    %153 = vmatpush1.msra.mxu0 0.0
    %154 = vmatprep.subr.mxu0 0.0
    %155 = vmatpush1.msra.mxu0 0.0
    %156 = vmatprep.subr.mxu0 0.0
    %157 = vmatpush1.msra.mxu0 0.0
    %158 = vmatprep.subr.mxu0 0.0
    %159 = vmatpush1.msra.mxu0 0.0
    %160 = vmatprep.subr.mxu0 0.0
    %161 = vmatpush1.msra.mxu0 0.0
    %162 = vmatprep.subr.mxu0 0.0
    %163 = vmatpush1.msra.mxu0 0.0
    %164 = vmatprep.subr.mxu0 0.0
    %165 = vmatpush1.msra.mxu0 0.0
    %166 = vmatprep.subr.mxu0 0.0
    %167 = vmatpush1.msra.mxu0 0.0
    %168 = vmatprep.subr.mxu0 0.0
    %169 = vmatpush1.msra.mxu0 0.0
    %170 = vmatprep.subr.mxu0 0.0
    %171 = vmatpush1.msra.mxu0 0.0
    %172 = vmatprep.subr.mxu0 0.0
    %173 = vmatpush1.msra.mxu0 0.0
    %174 = vmatprep.subr.mxu0 0.0
    %175 = vmatpush1.msra.mxu0 0.0
    %176 = vmatprep.subr.mxu0 0.0
    %177 = vmatpush1.msra.mxu0 0.0
    %178 = vmatprep.subr.mxu0 0.0
    %179 = vmatpush1.msra.mxu0 0.0
    %180 = vmatprep.subr.mxu0 0.0
    %181 = vmatpush1.msra.mxu0 0.0
    %182 = vmatprep.subr.mxu0 0.0
    %183 = vmatpush1.msra.mxu0 0.0
    %184 = vmatprep.subr.mxu0 0.0
    %185 = vmatpush1.msra.mxu0 0.0
    %186 = vmatprep.subr.mxu0 0.0
    %187 = vmatpush1.msra.mxu0 0.0
    %188 = vmatprep.subr.mxu0 0.0
    %189 = vmatpush1.msra.mxu0 0.0
    %190 = vmatprep.subr.mxu0 0.0
    %191 = vmatpush1.msra.mxu0 0.0
    %192 = vmatprep.mubr.f32.mxu0 0.0
    %193 = vmatmul.mubr.f32.gmra.mrb[0].mxu0 %v126
    %v194 = vpop.f32.mrb[0].mxu0
    %v195 = vadd.f32 0.0, %v194
    %v196 = vpop.f32.mrb[0].mxu0
    %197 = vdwg.mxu0
    %v199 = vlaneseq
    %v200 = vshrl.u32 %v199, 7
    %v201 = vsub.s32 0, %v200
    %v202 = vrot.slane %v123, %v201
    %v204 = vadd.f32 %v202, %v195
    %vm205 = vcmask 523264
    %v207 = vsel %vm205, %v121, 0
    %209 = vmatprep.subr.mxu0 0.0
    %210 = vmatpush1.msra.mxu0 %v29
    %211 = vmatprep.subr.mxu0 0.0
    %212 = vmatpush1.msra.mxu0 %v30
    %213 = vmatprep.subr.mxu0 0.0
    %214 = vmatpush1.msra.mxu0 %v31
    %215 = vmatprep.subr.mxu0 0.0
    %216 = vmatpush1.msra.mxu0 %v32
    %217 = vmatprep.subr.mxu0 0.0
    %218 = vmatpush1.msra.mxu0 %v33
    %219 = vmatprep.subr.mxu0 0.0
    %220 = vmatpush1.msra.mxu0 %v34
    %221 = vmatprep.subr.mxu0 0.0
    %222 = vmatpush1.msra.mxu0 %v35
    %223 = vmatprep.subr.mxu0 0.0
    %224 = vmatpush1.msra.mxu0 %v36
    %225 = vmatprep.subr.mxu0 0.0
    %226 = vmatpush1.msra.mxu0 0.0
    %227 = vmatprep.subr.mxu0 0.0
    %228 = vmatpush1.msra.mxu0 0.0
    %229 = vmatprep.subr.mxu0 0.0
    %230 = vmatpush1.msra.mxu0 0.0
    %231 = vmatprep.subr.mxu0 0.0
    %232 = vmatpush1.msra.mxu0 0.0
    %233 = vmatprep.subr.mxu0 0.0
    %234 = vmatpush1.msra.mxu0 0.0
    %235 = vmatprep.subr.mxu0 0.0
    %236 = vmatpush1.msra.mxu0 0.0
    %237 = vmatprep.subr.mxu0 0.0
    %238 = vmatpush1.msra.mxu0 0.0
    %239 = vmatprep.subr.mxu0 0.0
    %240 = vmatpush1.msra.mxu0 0.0
    %241 = vmatprep.subr.mxu0 0.0
    %242 = vmatpush1.msra.mxu0 0.0
    %243 = vmatprep.subr.mxu0 0.0
    %244 = vmatpush1.msra.mxu0 0.0
    %245 = vmatprep.subr.mxu0 0.0
    %246 = vmatpush1.msra.mxu0 0.0
    %247 = vmatprep.subr.mxu0 0.0
    %248 = vmatpush1.msra.mxu0 0.0
    %249 = vmatprep.subr.mxu0 0.0
    %250 = vmatpush1.msra.mxu0 0.0
    %251 = vmatprep.subr.mxu0 0.0
    %252 = vmatpush1.msra.mxu0 0.0
    %253 = vmatprep.subr.mxu0 0.0
    %254 = vmatpush1.msra.mxu0 0.0
    %255 = vmatprep.subr.mxu0 0.0
    %256 = vmatpush1.msra.mxu0 0.0
    %257 = vmatprep.subr.mxu0 0.0
    %258 = vmatpush1.msra.mxu0 0.0
    %259 = vmatprep.subr.mxu0 0.0
    %260 = vmatpush1.msra.mxu0 0.0
    %261 = vmatprep.subr.mxu0 0.0
    %262 = vmatpush1.msra.mxu0 0.0
    %263 = vmatprep.subr.mxu0 0.0
    %264 = vmatpush1.msra.mxu0 0.0
    %265 = vmatprep.subr.mxu0 0.0
    %266 = vmatpush1.msra.mxu0 0.0
    %267 = vmatprep.subr.mxu0 0.0
    %268 = vmatpush1.msra.mxu0 0.0
    %269 = vmatprep.subr.mxu0 0.0
    %270 = vmatpush1.msra.mxu0 0.0
    %271 = vmatprep.subr.mxu0 0.0
    %272 = vmatpush1.msra.mxu0 0.0
    %273 = vmatprep.mubr.f32.mxu0 0.0
    %274 = vmatmul.mubr.f32.gmra.mrb[0].mxu0 %v207
    %v275 = vpop.f32.mrb[0].mxu0
    %v276 = vadd.f32 %v204, %v275
    %v277 = vpop.f32.mrb[0].mxu0
    %278 = vdwg.mxu0
    %v279 = vtanh.pop %v276
    %s280 = scalar_lea.vmem %s3, 2
    %v281 = vld [vmem:[%s280] sm:$0x1]
    %282 = vrot.lane.b32.xlu0 %v38, 112
    %v283 = vpop.permute.xlu0 %282
    %v284 = vsel %vm40, %v283, 0
    %286 = vmatprep.subr.mxu0 0.0
    %287 = vmatpush1.msra.mxu0 %v37
    %288 = vmatprep.subr.mxu0 0.0
    %289 = vmatpush1.msra.mxu0 0.0
    %290 = vmatprep.subr.mxu0 0.0
    %291 = vmatpush1.msra.mxu0 0.0
    %292 = vmatprep.subr.mxu0 0.0
    %293 = vmatpush1.msra.mxu0 0.0
    %294 = vmatprep.subr.mxu0 0.0
    %295 = vmatpush1.msra.mxu0 0.0
    %296 = vmatprep.subr.mxu0 0.0
    %297 = vmatpush1.msra.mxu0 0.0
    %298 = vmatprep.subr.mxu0 0.0
    %299 = vmatpush1.msra.mxu0 0.0
    %300 = vmatprep.subr.mxu0 0.0
    %301 = vmatpush1.msra.mxu0 0.0
    %302 = vmatprep.subr.mxu0 0.0
    %303 = vmatpush1.msra.mxu0 0.0
    %304 = vmatprep.subr.mxu0 0.0
    %305 = vmatpush1.msra.mxu0 0.0
    %306 = vmatprep.subr.mxu0 0.0
    %307 = vmatpush1.msra.mxu0 0.0
    %308 = vmatprep.subr.mxu0 0.0
    %309 = vmatpush1.msra.mxu0 0.0
    %310 = vmatprep.subr.mxu0 0.0
    %311 = vmatpush1.msra.mxu0 0.0
    %312 = vmatprep.subr.mxu0 0.0
    %313 = vmatpush1.msra.mxu0 0.0
    %314 = vmatprep.subr.mxu0 0.0
    %315 = vmatpush1.msra.mxu0 0.0
    %316 = vmatprep.subr.mxu0 0.0
    %317 = vmatpush1.msra.mxu0 0.0
    %318 = vmatprep.subr.mxu0 0.0
    %319 = vmatpush1.msra.mxu0 0.0
    %320 = vmatprep.subr.mxu0 0.0
    %321 = vmatpush1.msra.mxu0 0.0
    %322 = vmatprep.subr.mxu0 0.0
    %323 = vmatpush1.msra.mxu0 0.0
    %324 = vmatprep.subr.mxu0 0.0
    %325 = vmatpush1.msra.mxu0 0.0
    %326 = vmatprep.subr.mxu0 0.0
    %327 = vmatpush1.msra.mxu0 0.0
    %328 = vmatprep.subr.mxu0 0.0
    %329 = vmatpush1.msra.mxu0 0.0
    %330 = vmatprep.subr.mxu0 0.0
    %331 = vmatpush1.msra.mxu0 0.0
    %332 = vmatprep.subr.mxu0 0.0
    %333 = vmatpush1.msra.mxu0 0.0
    %334 = vmatprep.subr.mxu0 0.0
    %335 = vmatpush1.msra.mxu0 0.0
    %336 = vmatprep.subr.mxu0 0.0
    %337 = vmatpush1.msra.mxu0 0.0
    %338 = vmatprep.subr.mxu0 0.0
    %339 = vmatpush1.msra.mxu0 0.0
    %340 = vmatprep.subr.mxu0 0.0
    %341 = vmatpush1.msra.mxu0 0.0
    %342 = vmatprep.subr.mxu0 0.0
    %343 = vmatpush1.msra.mxu0 0.0
    %344 = vmatprep.subr.mxu0 0.0
    %345 = vmatpush1.msra.mxu0 0.0
    %346 = vmatprep.subr.mxu0 0.0
    %347 = vmatpush1.msra.mxu0 0.0
    %348 = vmatprep.subr.mxu0 0.0
    %349 = vmatpush1.msra.mxu0 0.0
    %350 = vmatprep.mubr.f32.mxu0 0.0
    %351 = vmatmul.mubr.f32.gmra.mrb[0].mxu0 %v284
    %v352 = vpop.f32.mrb[0].mxu0
    %v353 = vadd.f32 0.0, %v352
    %v354 = vpop.f32.mrb[0].mxu0
    %355 = vdwg.mxu0
    %v357 = vlaneseq
    %v358 = vshrl.u32 %v357, 7
    %v359 = vsub.s32 0, %v358
    %v360 = vrot.slane %v281, %v359
    %v362 = vadd.f32 %v360, %v353
    %v364 = vsel %vm205, %v279, 0
    %366 = vmatprep.subr.mxu0 0.0
    %367 = vmatpush1.msra.mxu0 %v29
    %368 = vmatprep.subr.mxu0 0.0
    %369 = vmatpush1.msra.mxu0 %v30
    %370 = vmatprep.subr.mxu0 0.0
    %371 = vmatpush1.msra.mxu0 %v31
    %372 = vmatprep.subr.mxu0 0.0
    %373 = vmatpush1.msra.mxu0 %v32
    %374 = vmatprep.subr.mxu0 0.0
    %375 = vmatpush1.msra.mxu0 %v33
    %376 = vmatprep.subr.mxu0 0.0
    %377 = vmatpush1.msra.mxu0 %v34
    %378 = vmatprep.subr.mxu0 0.0
    %379 = vmatpush1.msra.mxu0 %v35
    %380 = vmatprep.subr.mxu0 0.0
    %381 = vmatpush1.msra.mxu0 %v36
    %382 = vmatprep.subr.mxu0 0.0
    %383 = vmatpush1.msra.mxu0 0.0
    %384 = vmatprep.subr.mxu0 0.0
    %385 = vmatpush1.msra.mxu0 0.0
    %386 = vmatprep.subr.mxu0 0.0
    %387 = vmatpush1.msra.mxu0 0.0
    %388 = vmatprep.subr.mxu0 0.0
    %389 = vmatpush1.msra.mxu0 0.0
    %390 = vmatprep.subr.mxu0 0.0
    %391 = vmatpush1.msra.mxu0 0.0
    %392 = vmatprep.subr.mxu0 0.0
    %393 = vmatpush1.msra.mxu0 0.0
    %394 = vmatprep.subr.mxu0 0.0
    %395 = vmatpush1.msra.mxu0 0.0
    %396 = vmatprep.subr.mxu0 0.0
    %397 = vmatpush1.msra.mxu0 0.0
    %398 = vmatprep.subr.mxu0 0.0
    %399 = vmatpush1.msra.mxu0 0.0
    %400 = vmatprep.subr.mxu0 0.0
    %401 = vmatpush1.msra.mxu0 0.0
    %402 = vmatprep.subr.mxu0 0.0
    %403 = vmatpush1.msra.mxu0 0.0
    %404 = vmatprep.subr.mxu0 0.0
    %405 = vmatpush1.msra.mxu0 0.0
    %406 = vmatprep.subr.mxu0 0.0
    %407 = vmatpush1.msra.mxu0 0.0
    %408 = vmatprep.subr.mxu0 0.0
    %409 = vmatpush1.msra.mxu0 0.0
    %410 = vmatprep.subr.mxu0 0.0
    %411 = vmatpush1.msra.mxu0 0.0
    %412 = vmatprep.subr.mxu0 0.0
    %413 = vmatpush1.msra.mxu0 0.0
    %414 = vmatprep.subr.mxu0 0.0
    %415 = vmatpush1.msra.mxu0 0.0
    %416 = vmatprep.subr.mxu0 0.0
    %417 = vmatpush1.msra.mxu0 0.0
    %418 = vmatprep.subr.mxu0 0.0
    %419 = vmatpush1.msra.mxu0 0.0
    %420 = vmatprep.subr.mxu0 0.0
    %421 = vmatpush1.msra.mxu0 0.0
    %422 = vmatprep.subr.mxu0 0.0
    %423 = vmatpush1.msra.mxu0 0.0
    %424 = vmatprep.subr.mxu0 0.0
    %425 = vmatpush1.msra.mxu0 0.0
    %426 = vmatprep.subr.mxu0 0.0
    %427 = vmatpush1.msra.mxu0 0.0
    %428 = vmatprep.subr.mxu0 0.0
    %429 = vmatpush1.msra.mxu0 0.0
    %430 = vmatprep.mubr.f32.mxu0 0.0
    %431 = vmatmul.mubr.f32.gmra.mrb[0].mxu0 %v364
    %v432 = vpop.f32.mrb[0].mxu0
    %v433 = vadd.f32 %v362, %v432
    %v434 = vpop.f32.mrb[0].mxu0
    %435 = vdwg.mxu0
    %v436 = vtanh.pop %v433
    %s437 = scalar_lea.vmem %s3, 3
    %v438 = vld [vmem:[%s437] sm:$0x1]
    %439 = vrot.lane.b32.xlu0 %v38, 104
    %v440 = vpop.permute.xlu0 %439
    %v441 = vsel %vm40, %v440, 0
    %443 = vmatprep.subr.mxu0 0.0
    %444 = vmatpush1.msra.mxu0 %v37
    %445 = vmatprep.subr.mxu0 0.0
    %446 = vmatpush1.msra.mxu0 0.0
    %447 = vmatprep.subr.mxu0 0.0
    %448 = vmatpush1.msra.mxu0 0.0
    %449 = vmatprep.subr.mxu0 0.0
    %450 = vmatpush1.msra.mxu0 0.0
    %451 = vmatprep.subr.mxu0 0.0
    %452 = vmatpush1.msra.mxu0 0.0
    %453 = vmatprep.subr.mxu0 0.0
    %454 = vmatpush1.msra.mxu0 0.0
    %455 = vmatprep.subr.mxu0 0.0
    %456 = vmatpush1.msra.mxu0 0.0
    %457 = vmatprep.subr.mxu0 0.0
    %458 = vmatpush1.msra.mxu0 0.0
    %459 = vmatprep.subr.mxu0 0.0
    %460 = vmatpush1.msra.mxu0 0.0
    %461 = vmatprep.subr.mxu0 0.0
    %462 = vmatpush1.msra.mxu0 0.0
    %463 = vmatprep.subr.mxu0 0.0
    %464 = vmatpush1.msra.mxu0 0.0
    %465 = vmatprep.subr.mxu0 0.0
    %466 = vmatpush1.msra.mxu0 0.0
    %467 = vmatprep.subr.mxu0 0.0
    %468 = vmatpush1.msra.mxu0 0.0
    %469 = vmatprep.subr.mxu0 0.0
    %470 = vmatpush1.msra.mxu0 0.0
    %471 = vmatprep.subr.mxu0 0.0
    %472 = vmatpush1.msra.mxu0 0.0
    %473 = vmatprep.subr.mxu0 0.0
    %474 = vmatpush1.msra.mxu0 0.0
    %475 = vmatprep.subr.mxu0 0.0
    %476 = vmatpush1.msra.mxu0 0.0
    %477 = vmatprep.subr.mxu0 0.0
    %478 = vmatpush1.msra.mxu0 0.0
    %479 = vmatprep.subr.mxu0 0.0
    %480 = vmatpush1.msra.mxu0 0.0
    %481 = vmatprep.subr.mxu0 0.0
    %482 = vmatpush1.msra.mxu0 0.0
    %483 = vmatprep.subr.mxu0 0.0
    %484 = vmatpush1.msra.mxu0 0.0
    %485 = vmatprep.subr.mxu0 0.0
    %486 = vmatpush1.msra.mxu0 0.0
    %487 = vmatprep.subr.mxu0 0.0
    %488 = vmatpush1.msra.mxu0 0.0
    %489 = vmatprep.subr.mxu0 0.0
    %490 = vmatpush1.msra.mxu0 0.0
    %491 = vmatprep.subr.mxu0 0.0
    %492 = vmatpush1.msra.mxu0 0.0
    %493 = vmatprep.subr.mxu0 0.0
    %494 = vmatpush1.msra.mxu0 0.0
    %495 = vmatprep.subr.mxu0 0.0
    %496 = vmatpush1.msra.mxu0 0.0
    %497 = vmatprep.subr.mxu0 0.0
    %498 = vmatpush1.msra.mxu0 0.0
    %499 = vmatprep.subr.mxu0 0.0
    %500 = vmatpush1.msra.mxu0 0.0
    %501 = vmatprep.subr.mxu0 0.0
    %502 = vmatpush1.msra.mxu0 0.0
    %503 = vmatprep.subr.mxu0 0.0
    %504 = vmatpush1.msra.mxu0 0.0
    %505 = vmatprep.subr.mxu0 0.0
    %506 = vmatpush1.msra.mxu0 0.0
    %507 = vmatprep.mubr.f32.mxu0 0.0
    %508 = vmatmul.mubr.f32.gmra.mrb[0].mxu0 %v441
    %v509 = vpop.f32.mrb[0].mxu0
    %v510 = vadd.f32 0.0, %v509
    %v511 = vpop.f32.mrb[0].mxu0
    %512 = vdwg.mxu0
    %v514 = vlaneseq
    %v515 = vshrl.u32 %v514, 7
    %v516 = vsub.s32 0, %v515
    %v517 = vrot.slane %v438, %v516
    %v519 = vadd.f32 %v517, %v510
    %v521 = vsel %vm205, %v436, 0
    %523 = vmatprep.subr.mxu0 0.0
    %524 = vmatpush1.msra.mxu0 %v29
    %525 = vmatprep.subr.mxu0 0.0
    %526 = vmatpush1.msra.mxu0 %v30
    %527 = vmatprep.subr.mxu0 0.0
    %528 = vmatpush1.msra.mxu0 %v31
    %529 = vmatprep.subr.mxu0 0.0
    %530 = vmatpush1.msra.mxu0 %v32
    %531 = vmatprep.subr.mxu0 0.0
    %532 = vmatpush1.msra.mxu0 %v33
    %533 = vmatprep.subr.mxu0 0.0
    %534 = vmatpush1.msra.mxu0 %v34
    %535 = vmatprep.subr.mxu0 0.0
    %536 = vmatpush1.msra.mxu0 %v35
    %537 = vmatprep.subr.mxu0 0.0
    %538 = vmatpush1.msra.mxu0 %v36
    %539 = vmatprep.subr.mxu0 0.0
    %540 = vmatpush1.msra.mxu0 0.0
    %541 = vmatprep.subr.mxu0 0.0
    %542 = vmatpush1.msra.mxu0 0.0
    %543 = vmatprep.subr.mxu0 0.0
    %544 = vmatpush1.msra.mxu0 0.0
    %545 = vmatprep.subr.mxu0 0.0
    %546 = vmatpush1.msra.mxu0 0.0
    %547 = vmatprep.subr.mxu0 0.0
    %548 = vmatpush1.msra.mxu0 0.0
    %549 = vmatprep.subr.mxu0 0.0
    %550 = vmatpush1.msra.mxu0 0.0
    %551 = vmatprep.subr.mxu0 0.0
    %552 = vmatpush1.msra.mxu0 0.0
    %553 = vmatprep.subr.mxu0 0.0
    %554 = vmatpush1.msra.mxu0 0.0
    %555 = vmatprep.subr.mxu0 0.0
    %556 = vmatpush1.msra.mxu0 0.0
    %557 = vmatprep.subr.mxu0 0.0
    %558 = vmatpush1.msra.mxu0 0.0
    %559 = vmatprep.subr.mxu0 0.0
    %560 = vmatpush1.msra.mxu0 0.0
    %561 = vmatprep.subr.mxu0 0.0
    %562 = vmatpush1.msra.mxu0 0.0
    %563 = vmatprep.subr.mxu0 0.0
    %564 = vmatpush1.msra.mxu0 0.0
    %565 = vmatprep.subr.mxu0 0.0
    %566 = vmatpush1.msra.mxu0 0.0
    %567 = vmatprep.subr.mxu0 0.0
    %568 = vmatpush1.msra.mxu0 0.0
    %569 = vmatprep.subr.mxu0 0.0
    %570 = vmatpush1.msra.mxu0 0.0
    %571 = vmatprep.subr.mxu0 0.0
    %572 = vmatpush1.msra.mxu0 0.0
    %573 = vmatprep.subr.mxu0 0.0
    %574 = vmatpush1.msra.mxu0 0.0
    %575 = vmatprep.subr.mxu0 0.0
    %576 = vmatpush1.msra.mxu0 0.0
    %577 = vmatprep.subr.mxu0 0.0
    %578 = vmatpush1.msra.mxu0 0.0
    %579 = vmatprep.subr.mxu0 0.0
    %580 = vmatpush1.msra.mxu0 0.0
    %581 = vmatprep.subr.mxu0 0.0
    %582 = vmatpush1.msra.mxu0 0.0
    %583 = vmatprep.subr.mxu0 0.0
    %584 = vmatpush1.msra.mxu0 0.0
    %585 = vmatprep.subr.mxu0 0.0
    %586 = vmatpush1.msra.mxu0 0.0
    %587 = vmatprep.mubr.f32.mxu0 0.0
    %588 = vmatmul.mubr.f32.gmra.mrb[0].mxu0 %v521
    %v589 = vpop.f32.mrb[0].mxu0
    %v590 = vadd.f32 %v519, %v589
    %v591 = vpop.f32.mrb[0].mxu0
    %592 = vdwg.mxu0
    %v593 = vtanh.pop %v590
    %s594 = scalar_lea.vmem %s3, 4
    %v595 = vld [vmem:[%s594] sm:$0x1]
    %596 = vrot.lane.b32.xlu0 %v38, 96
    %v597 = vpop.permute.xlu0 %596
    %v598 = vsel %vm40, %v597, 0
    %600 = vmatprep.subr.mxu0 0.0
    %601 = vmatpush1.msra.mxu0 %v37
    %602 = vmatprep.subr.mxu0 0.0
    %603 = vmatpush1.msra.mxu0 0.0
    %604 = vmatprep.subr.mxu0 0.0
    %605 = vmatpush1.msra.mxu0 0.0
    %606 = vmatprep.subr.mxu0 0.0
    %607 = vmatpush1.msra.mxu0 0.0
    %608 = vmatprep.subr.mxu0 0.0
    %609 = vmatpush1.msra.mxu0 0.0
    %610 = vmatprep.subr.mxu0 0.0
    %611 = vmatpush1.msra.mxu0 0.0
    %612 = vmatprep.subr.mxu0 0.0
    %613 = vmatpush1.msra.mxu0 0.0
    %614 = vmatprep.subr.mxu0 0.0
    %615 = vmatpush1.msra.mxu0 0.0
    %616 = vmatprep.subr.mxu0 0.0
    %617 = vmatpush1.msra.mxu0 0.0
    %618 = vmatprep.subr.mxu0 0.0
    %619 = vmatpush1.msra.mxu0 0.0
    %620 = vmatprep.subr.mxu0 0.0
    %621 = vmatpush1.msra.mxu0 0.0
    %622 = vmatprep.subr.mxu0 0.0
    %623 = vmatpush1.msra.mxu0 0.0
    %624 = vmatprep.subr.mxu0 0.0
    %625 = vmatpush1.msra.mxu0 0.0
    %626 = vmatprep.subr.mxu0 0.0
    %627 = vmatpush1.msra.mxu0 0.0
    %628 = vmatprep.subr.mxu0 0.0
    %629 = vmatpush1.msra.mxu0 0.0
    %630 = vmatprep.subr.mxu0 0.0
    %631 = vmatpush1.msra.mxu0 0.0
    %632 = vmatprep.subr.mxu0 0.0
    %633 = vmatpush1.msra.mxu0 0.0
    %634 = vmatprep.subr.mxu0 0.0
    %635 = vmatpush1.msra.mxu0 0.0
    %636 = vmatprep.subr.mxu0 0.0
    %637 = vmatpush1.msra.mxu0 0.0
    %638 = vmatprep.subr.mxu0 0.0
    %639 = vmatpush1.msra.mxu0 0.0
    %640 = vmatprep.subr.mxu0 0.0
    %641 = vmatpush1.msra.mxu0 0.0
    %642 = vmatprep.subr.mxu0 0.0
    %643 = vmatpush1.msra.mxu0 0.0
    %644 = vmatprep.subr.mxu0 0.0
    %645 = vmatpush1.msra.mxu0 0.0
    %646 = vmatprep.subr.mxu0 0.0
    %647 = vmatpush1.msra.mxu0 0.0
    %648 = vmatprep.subr.mxu0 0.0
    %649 = vmatpush1.msra.mxu0 0.0
    %650 = vmatprep.subr.mxu0 0.0
    %651 = vmatpush1.msra.mxu0 0.0
    %652 = vmatprep.subr.mxu0 0.0
    %653 = vmatpush1.msra.mxu0 0.0
    %654 = vmatprep.subr.mxu0 0.0
    %655 = vmatpush1.msra.mxu0 0.0
    %656 = vmatprep.subr.mxu0 0.0
    %657 = vmatpush1.msra.mxu0 0.0
    %658 = vmatprep.subr.mxu0 0.0
    %659 = vmatpush1.msra.mxu0 0.0
    %660 = vmatprep.subr.mxu0 0.0
    %661 = vmatpush1.msra.mxu0 0.0
    %662 = vmatprep.subr.mxu0 0.0
    %663 = vmatpush1.msra.mxu0 0.0
    %664 = vmatprep.mubr.f32.mxu0 0.0
    %665 = vmatmul.mubr.f32.gmra.mrb[0].mxu0 %v598
    %v666 = vpop.f32.mrb[0].mxu0
    %v667 = vadd.f32 0.0, %v666
    %v668 = vpop.f32.mrb[0].mxu0
    %669 = vdwg.mxu0
    %v671 = vlaneseq
    %v672 = vshrl.u32 %v671, 7
    %v673 = vsub.s32 0, %v672
    %v674 = vrot.slane %v595, %v673
    %v676 = vadd.f32 %v674, %v667
    %v678 = vsel %vm205, %v593, 0
    %680 = vmatprep.subr.mxu0 0.0
    %681 = vmatpush1.msra.mxu0 %v29
    %682 = vmatprep.subr.mxu0 0.0
    %683 = vmatpush1.msra.mxu0 %v30
    %684 = vmatprep.subr.mxu0 0.0
    %685 = vmatpush1.msra.mxu0 %v31
    %686 = vmatprep.subr.mxu0 0.0
    %687 = vmatpush1.msra.mxu0 %v32
    %688 = vmatprep.subr.mxu0 0.0
    %689 = vmatpush1.msra.mxu0 %v33
    %690 = vmatprep.subr.mxu0 0.0
    %691 = vmatpush1.msra.mxu0 %v34
    %692 = vmatprep.subr.mxu0 0.0
    %693 = vmatpush1.msra.mxu0 %v35
    %694 = vmatprep.subr.mxu0 0.0
    %695 = vmatpush1.msra.mxu0 %v36
    %696 = vmatprep.subr.mxu0 0.0
    %697 = vmatpush1.msra.mxu0 0.0
    %698 = vmatprep.subr.mxu0 0.0
    %699 = vmatpush1.msra.mxu0 0.0
    %700 = vmatprep.subr.mxu0 0.0
    %701 = vmatpush1.msra.mxu0 0.0
    %702 = vmatprep.subr.mxu0 0.0
    %703 = vmatpush1.msra.mxu0 0.0
    %704 = vmatprep.subr.mxu0 0.0
    %705 = vmatpush1.msra.mxu0 0.0
    %706 = vmatprep.subr.mxu0 0.0
    %707 = vmatpush1.msra.mxu0 0.0
    %708 = vmatprep.subr.mxu0 0.0
    %709 = vmatpush1.msra.mxu0 0.0
    %710 = vmatprep.subr.mxu0 0.0
    %711 = vmatpush1.msra.mxu0 0.0
    %712 = vmatprep.subr.mxu0 0.0
    %713 = vmatpush1.msra.mxu0 0.0
    %714 = vmatprep.subr.mxu0 0.0
    %715 = vmatpush1.msra.mxu0 0.0
    %716 = vmatprep.subr.mxu0 0.0
    %717 = vmatpush1.msra.mxu0 0.0
    %718 = vmatprep.subr.mxu0 0.0
    %719 = vmatpush1.msra.mxu0 0.0
    %720 = vmatprep.subr.mxu0 0.0
    %721 = vmatpush1.msra.mxu0 0.0
    %722 = vmatprep.subr.mxu0 0.0
    %723 = vmatpush1.msra.mxu0 0.0
    %724 = vmatprep.subr.mxu0 0.0
    %725 = vmatpush1.msra.mxu0 0.0
    %726 = vmatprep.subr.mxu0 0.0
    %727 = vmatpush1.msra.mxu0 0.0
    %728 = vmatprep.subr.mxu0 0.0
    %729 = vmatpush1.msra.mxu0 0.0
    %730 = vmatprep.subr.mxu0 0.0
    %731 = vmatpush1.msra.mxu0 0.0
    %732 = vmatprep.subr.mxu0 0.0
    %733 = vmatpush1.msra.mxu0 0.0
    %734 = vmatprep.subr.mxu0 0.0
    %735 = vmatpush1.msra.mxu0 0.0
    %736 = vmatprep.subr.mxu0 0.0
    %737 = vmatpush1.msra.mxu0 0.0
    %738 = vmatprep.subr.mxu0 0.0
    %739 = vmatpush1.msra.mxu0 0.0
    %740 = vmatprep.subr.mxu0 0.0
    %741 = vmatpush1.msra.mxu0 0.0
    %742 = vmatprep.subr.mxu0 0.0
    %743 = vmatpush1.msra.mxu0 0.0
    %744 = vmatprep.mubr.f32.mxu0 0.0
    %745 = vmatmul.mubr.f32.gmra.mrb[0].mxu0 %v678
    %v746 = vpop.f32.mrb[0].mxu0
    %v747 = vadd.f32 %v676, %v746
    %v748 = vpop.f32.mrb[0].mxu0
    %749 = vdwg.mxu0
    %v750 = vtanh.pop %v747
    %s751 = scalar_lea.vmem %s3, 5
    %v752 = vld [vmem:[%s751] sm:$0x1]
    %753 = vrot.lane.b32.xlu0 %v38, 88
    %v754 = vpop.permute.xlu0 %753
    %v755 = vsel %vm40, %v754, 0
    %757 = vmatprep.subr.mxu0 0.0
    %758 = vmatpush1.msra.mxu0 %v37
    %759 = vmatprep.subr.mxu0 0.0
    %760 = vmatpush1.msra.mxu0 0.0
    %761 = vmatprep.subr.mxu0 0.0
    %762 = vmatpush1.msra.mxu0 0.0
    %763 = vmatprep.subr.mxu0 0.0
    %764 = vmatpush1.msra.mxu0 0.0
    %765 = vmatprep.subr.mxu0 0.0
    %766 = vmatpush1.msra.mxu0 0.0
    %767 = vmatprep.subr.mxu0 0.0
    %768 = vmatpush1.msra.mxu0 0.0
    %769 = vmatprep.subr.mxu0 0.0
    %770 = vmatpush1.msra.mxu0 0.0
    %771 = vmatprep.subr.mxu0 0.0
    %772 = vmatpush1.msra.mxu0 0.0
    %773 = vmatprep.subr.mxu0 0.0
    %774 = vmatpush1.msra.mxu0 0.0
    %775 = vmatprep.subr.mxu0 0.0
    %776 = vmatpush1.msra.mxu0 0.0
    %777 = vmatprep.subr.mxu0 0.0
    %778 = vmatpush1.msra.mxu0 0.0
    %779 = vmatprep.subr.mxu0 0.0
    %780 = vmatpush1.msra.mxu0 0.0
    %781 = vmatprep.subr.mxu0 0.0
    %782 = vmatpush1.msra.mxu0 0.0
    %783 = vmatprep.subr.mxu0 0.0
    %784 = vmatpush1.msra.mxu0 0.0
    %785 = vmatprep.subr.mxu0 0.0
    %786 = vmatpush1.msra.mxu0 0.0
    %787 = vmatprep.subr.mxu0 0.0
    %788 = vmatpush1.msra.mxu0 0.0
    %789 = vmatprep.subr.mxu0 0.0
    %790 = vmatpush1.msra.mxu0 0.0
    %791 = vmatprep.subr.mxu0 0.0
    %792 = vmatpush1.msra.mxu0 0.0
    %793 = vmatprep.subr.mxu0 0.0
    %794 = vmatpush1.msra.mxu0 0.0
    %795 = vmatprep.subr.mxu0 0.0
    %796 = vmatpush1.msra.mxu0 0.0
    %797 = vmatprep.subr.mxu0 0.0
    %798 = vmatpush1.msra.mxu0 0.0
    %799 = vmatprep.subr.mxu0 0.0
    %800 = vmatpush1.msra.mxu0 0.0
    %801 = vmatprep.subr.mxu0 0.0
    %802 = vmatpush1.msra.mxu0 0.0
    %803 = vmatprep.subr.mxu0 0.0
    %804 = vmatpush1.msra.mxu0 0.0
    %805 = vmatprep.subr.mxu0 0.0
    %806 = vmatpush1.msra.mxu0 0.0
    %807 = vmatprep.subr.mxu0 0.0
    %808 = vmatpush1.msra.mxu0 0.0
    %809 = vmatprep.subr.mxu0 0.0
    %810 = vmatpush1.msra.mxu0 0.0
    %811 = vmatprep.subr.mxu0 0.0
    %812 = vmatpush1.msra.mxu0 0.0
    %813 = vmatprep.subr.mxu0 0.0
    %814 = vmatpush1.msra.mxu0 0.0
    %815 = vmatprep.subr.mxu0 0.0
    %816 = vmatpush1.msra.mxu0 0.0
    %817 = vmatprep.subr.mxu0 0.0
    %818 = vmatpush1.msra.mxu0 0.0
    %819 = vmatprep.subr.mxu0 0.0
    %820 = vmatpush1.msra.mxu0 0.0
    %821 = vmatprep.mubr.f32.mxu0 0.0
    %822 = vmatmul.mubr.f32.gmra.mrb[0].mxu0 %v755
    %v823 = vpop.f32.mrb[0].mxu0
    %v824 = vadd.f32 0.0, %v823
    %v825 = vpop.f32.mrb[0].mxu0
    %826 = vdwg.mxu0
    %v828 = vlaneseq
    %v829 = vshrl.u32 %v828, 7
    %v830 = vsub.s32 0, %v829
    %v831 = vrot.slane %v752, %v830
    %v833 = vadd.f32 %v831, %v824
    %v835 = vsel %vm205, %v750, 0
    %837 = vmatprep.subr.mxu0 0.0
    %838 = vmatpush1.msra.mxu0 %v29
    %839 = vmatprep.subr.mxu0 0.0
    %840 = vmatpush1.msra.mxu0 %v30
    %841 = vmatprep.subr.mxu0 0.0
    %842 = vmatpush1.msra.mxu0 %v31
    %843 = vmatprep.subr.mxu0 0.0
    %844 = vmatpush1.msra.mxu0 %v32
    %845 = vmatprep.subr.mxu0 0.0
    %846 = vmatpush1.msra.mxu0 %v33
    %847 = vmatprep.subr.mxu0 0.0
    %848 = vmatpush1.msra.mxu0 %v34
    %849 = vmatprep.subr.mxu0 0.0
    %850 = vmatpush1.msra.mxu0 %v35
    %851 = vmatprep.subr.mxu0 0.0
    %852 = vmatpush1.msra.mxu0 %v36
    %853 = vmatprep.subr.mxu0 0.0
    %854 = vmatpush1.msra.mxu0 0.0
    %855 = vmatprep.subr.mxu0 0.0
    %856 = vmatpush1.msra.mxu0 0.0
    %857 = vmatprep.subr.mxu0 0.0
    %858 = vmatpush1.msra.mxu0 0.0
    %859 = vmatprep.subr.mxu0 0.0
    %860 = vmatpush1.msra.mxu0 0.0
    %861 = vmatprep.subr.mxu0 0.0
    %862 = vmatpush1.msra.mxu0 0.0
    %863 = vmatprep.subr.mxu0 0.0
    %864 = vmatpush1.msra.mxu0 0.0
    %865 = vmatprep.subr.mxu0 0.0
    %866 = vmatpush1.msra.mxu0 0.0
    %867 = vmatprep.subr.mxu0 0.0
    %868 = vmatpush1.msra.mxu0 0.0
    %869 = vmatprep.subr.mxu0 0.0
    %870 = vmatpush1.msra.mxu0 0.0
    %871 = vmatprep.subr.mxu0 0.0
    %872 = vmatpush1.msra.mxu0 0.0
    %873 = vmatprep.subr.mxu0 0.0
    %874 = vmatpush1.msra.mxu0 0.0
    %875 = vmatprep.subr.mxu0 0.0
    %876 = vmatpush1.msra.mxu0 0.0
    %877 = vmatprep.subr.mxu0 0.0
    %878 = vmatpush1.msra.mxu0 0.0
    %879 = vmatprep.subr.mxu0 0.0
    %880 = vmatpush1.msra.mxu0 0.0
    %881 = vmatprep.subr.mxu0 0.0
    %882 = vmatpush1.msra.mxu0 0.0
    %883 = vmatprep.subr.mxu0 0.0
    %884 = vmatpush1.msra.mxu0 0.0
    %885 = vmatprep.subr.mxu0 0.0
    %886 = vmatpush1.msra.mxu0 0.0
    %887 = vmatprep.subr.mxu0 0.0
    %888 = vmatpush1.msra.mxu0 0.0
    %889 = vmatprep.subr.mxu0 0.0
    %890 = vmatpush1.msra.mxu0 0.0
    %891 = vmatprep.subr.mxu0 0.0
    %892 = vmatpush1.msra.mxu0 0.0
    %893 = vmatprep.subr.mxu0 0.0
    %894 = vmatpush1.msra.mxu0 0.0
    %895 = vmatprep.subr.mxu0 0.0
    %896 = vmatpush1.msra.mxu0 0.0
    %897 = vmatprep.subr.mxu0 0.0
    %898 = vmatpush1.msra.mxu0 0.0
    %899 = vmatprep.subr.mxu0 0.0
    %900 = vmatpush1.msra.mxu0 0.0
    %901 = vmatprep.mubr.f32.mxu0 0.0
    %902 = vmatmul.mubr.f32.gmra.mrb[0].mxu0 %v835
    %v903 = vpop.f32.mrb[0].mxu0
    %v904 = vadd.f32 %v833, %v903
    %v905 = vpop.f32.mrb[0].mxu0
    %906 = vdwg.mxu0
    %v907 = vtanh.pop %v904
    %s908 = scalar_lea.vmem %s3, 6
    %v909 = vld [vmem:[%s908] sm:$0x1]
    %910 = vrot.lane.b32.xlu0 %v38, 80
    %v911 = vpop.permute.xlu0 %910
    %v912 = vsel %vm40, %v911, 0
    %914 = vmatprep.subr.mxu0 0.0
    %915 = vmatpush1.msra.mxu0 %v37
    %916 = vmatprep.subr.mxu0 0.0
    %917 = vmatpush1.msra.mxu0 0.0
    %918 = vmatprep.subr.mxu0 0.0
    %919 = vmatpush1.msra.mxu0 0.0
    %920 = vmatprep.subr.mxu0 0.0
    %921 = vmatpush1.msra.mxu0 0.0
    %922 = vmatprep.subr.mxu0 0.0
    %923 = vmatpush1.msra.mxu0 0.0
    %924 = vmatprep.subr.mxu0 0.0
    %925 = vmatpush1.msra.mxu0 0.0
    %926 = vmatprep.subr.mxu0 0.0
    %927 = vmatpush1.msra.mxu0 0.0
    %928 = vmatprep.subr.mxu0 0.0
    %929 = vmatpush1.msra.mxu0 0.0
    %930 = vmatprep.subr.mxu0 0.0
    %931 = vmatpush1.msra.mxu0 0.0
    %932 = vmatprep.subr.mxu0 0.0
    %933 = vmatpush1.msra.mxu0 0.0
    %934 = vmatprep.subr.mxu0 0.0
    %935 = vmatpush1.msra.mxu0 0.0
    %936 = vmatprep.subr.mxu0 0.0
    %937 = vmatpush1.msra.mxu0 0.0
    %938 = vmatprep.subr.mxu0 0.0
    %939 = vmatpush1.msra.mxu0 0.0
    %940 = vmatprep.subr.mxu0 0.0
    %941 = vmatpush1.msra.mxu0 0.0
    %942 = vmatprep.subr.mxu0 0.0
    %943 = vmatpush1.msra.mxu0 0.0
    %944 = vmatprep.subr.mxu0 0.0
    %945 = vmatpush1.msra.mxu0 0.0
    %946 = vmatprep.subr.mxu0 0.0
    %947 = vmatpush1.msra.mxu0 0.0
    %948 = vmatprep.subr.mxu0 0.0
    %949 = vmatpush1.msra.mxu0 0.0
    %950 = vmatprep.subr.mxu0 0.0
    %951 = vmatpush1.msra.mxu0 0.0
    %952 = vmatprep.subr.mxu0 0.0
    %953 = vmatpush1.msra.mxu0 0.0
    %954 = vmatprep.subr.mxu0 0.0
    %955 = vmatpush1.msra.mxu0 0.0
    %956 = vmatprep.subr.mxu0 0.0
    %957 = vmatpush1.msra.mxu0 0.0
    %958 = vmatprep.subr.mxu0 0.0
    %959 = vmatpush1.msra.mxu0 0.0
    %960 = vmatprep.subr.mxu0 0.0
    %961 = vmatpush1.msra.mxu0 0.0
    %962 = vmatprep.subr.mxu0 0.0
    %963 = vmatpush1.msra.mxu0 0.0
    %964 = vmatprep.subr.mxu0 0.0
    %965 = vmatpush1.msra.mxu0 0.0
    %966 = vmatprep.subr.mxu0 0.0
    %967 = vmatpush1.msra.mxu0 0.0
    %968 = vmatprep.subr.mxu0 0.0
    %969 = vmatpush1.msra.mxu0 0.0
    %970 = vmatprep.subr.mxu0 0.0
    %971 = vmatpush1.msra.mxu0 0.0
    %972 = vmatprep.subr.mxu0 0.0
    %973 = vmatpush1.msra.mxu0 0.0
    %974 = vmatprep.subr.mxu0 0.0
    %975 = vmatpush1.msra.mxu0 0.0
    %976 = vmatprep.subr.mxu0 0.0
    %977 = vmatpush1.msra.mxu0 0.0
    %978 = vmatprep.mubr.f32.mxu0 0.0
    %979 = vmatmul.mubr.f32.gmra.mrb[0].mxu0 %v912
    %v980 = vpop.f32.mrb[0].mxu0
    %v981 = vadd.f32 0.0, %v980
    %v982 = vpop.f32.mrb[0].mxu0
    %983 = vdwg.mxu0
    %v985 = vlaneseq
    %v986 = vshrl.u32 %v985, 7
    %v987 = vsub.s32 0, %v986
    %v988 = vrot.slane %v909, %v987
    %v990 = vadd.f32 %v988, %v981
    %v992 = vsel %vm205, %v907, 0
    %994 = vmatprep.subr.mxu0 0.0
    %995 = vmatpush1.msra.mxu0 %v29
    %996 = vmatprep.subr.mxu0 0.0
    %997 = vmatpush1.msra.mxu0 %v30
    %998 = vmatprep.subr.mxu0 0.0
    %999 = vmatpush1.msra.mxu0 %v31
    %1000 = vmatprep.subr.mxu0 0.0
    %1001 = vmatpush1.msra.mxu0 %v32
    %1002 = vmatprep.subr.mxu0 0.0
    %1003 = vmatpush1.msra.mxu0 %v33
    %1004 = vmatprep.subr.mxu0 0.0
    %1005 = vmatpush1.msra.mxu0 %v34
    %1006 = vmatprep.subr.mxu0 0.0
    %1007 = vmatpush1.msra.mxu0 %v35
    %1008 = vmatprep.subr.mxu0 0.0
    %1009 = vmatpush1.msra.mxu0 %v36
    %1010 = vmatprep.subr.mxu0 0.0
    %1011 = vmatpush1.msra.mxu0 0.0
    %1012 = vmatprep.subr.mxu0 0.0
    %1013 = vmatpush1.msra.mxu0 0.0
    %1014 = vmatprep.subr.mxu0 0.0
    %1015 = vmatpush1.msra.mxu0 0.0
    %1016 = vmatprep.subr.mxu0 0.0
    %1017 = vmatpush1.msra.mxu0 0.0
    %1018 = vmatprep.subr.mxu0 0.0
    %1019 = vmatpush1.msra.mxu0 0.0
    %1020 = vmatprep.subr.mxu0 0.0
    %1021 = vmatpush1.msra.mxu0 0.0
    %1022 = vmatprep.subr.mxu0 0.0
    %1023 = vmatpush1.msra.mxu0 0.0
    %1024 = vmatprep.subr.mxu0 0.0
    %1025 = vmatpush1.msra.mxu0 0.0
    %1026 = vmatprep.subr.mxu0 0.0
    %1027 = vmatpush1.msra.mxu0 0.0
    %1028 = vmatprep.subr.mxu0 0.0
    %1029 = vmatpush1.msra.mxu0 0.0
    %1030 = vmatprep.subr.mxu0 0.0
    %1031 = vmatpush1.msra.mxu0 0.0
    %1032 = vmatprep.subr.mxu0 0.0
    %1033 = vmatpush1.msra.mxu0 0.0
    %1034 = vmatprep.subr.mxu0 0.0
    %1035 = vmatpush1.msra.mxu0 0.0
    %1036 = vmatprep.subr.mxu0 0.0
    %1037 = vmatpush1.msra.mxu0 0.0
    %1038 = vmatprep.subr.mxu0 0.0
    %1039 = vmatpush1.msra.mxu0 0.0
    %1040 = vmatprep.subr.mxu0 0.0
    %1041 = vmatpush1.msra.mxu0 0.0
    %1042 = vmatprep.subr.mxu0 0.0
    %1043 = vmatpush1.msra.mxu0 0.0
    %1044 = vmatprep.subr.mxu0 0.0
    %1045 = vmatpush1.msra.mxu0 0.0
    %1046 = vmatprep.subr.mxu0 0.0
    %1047 = vmatpush1.msra.mxu0 0.0
    %1048 = vmatprep.subr.mxu0 0.0
    %1049 = vmatpush1.msra.mxu0 0.0
    %1050 = vmatprep.subr.mxu0 0.0
    %1051 = vmatpush1.msra.mxu0 0.0
    %1052 = vmatprep.subr.mxu0 0.0
    %1053 = vmatpush1.msra.mxu0 0.0
    %1054 = vmatprep.subr.mxu0 0.0
    %1055 = vmatpush1.msra.mxu0 0.0
    %1056 = vmatprep.subr.mxu0 0.0
    %1057 = vmatpush1.msra.mxu0 0.0
    %1058 = vmatprep.mubr.f32.mxu0 0.0
    %1059 = vmatmul.mubr.f32.gmra.mrb[0].mxu0 %v992
    %v1060 = vpop.f32.mrb[0].mxu0
    %v1061 = vadd.f32 %v990, %v1060
    %v1062 = vpop.f32.mrb[0].mxu0
    %1063 = vdwg.mxu0
    %v1064 = vtanh.pop %v1061
    %s1065 = scalar_lea.vmem %s3, 7
    %v1066 = vld [vmem:[%s1065] sm:$0x1]
    %1067 = vrot.lane.b32.xlu0 %v38, 72
    %v1068 = vpop.permute.xlu0 %1067
    %v1069 = vsel %vm40, %v1068, 0
    %1071 = vmatprep.subr.mxu0 0.0
    %1072 = vmatpush1.msra.mxu0 %v37
    %1073 = vmatprep.subr.mxu0 0.0
    %1074 = vmatpush1.msra.mxu0 0.0
    %1075 = vmatprep.subr.mxu0 0.0
    %1076 = vmatpush1.msra.mxu0 0.0
    %1077 = vmatprep.subr.mxu0 0.0
    %1078 = vmatpush1.msra.mxu0 0.0
    %1079 = vmatprep.subr.mxu0 0.0
    %1080 = vmatpush1.msra.mxu0 0.0
    %1081 = vmatprep.subr.mxu0 0.0
    %1082 = vmatpush1.msra.mxu0 0.0
    %1083 = vmatprep.subr.mxu0 0.0
    %1084 = vmatpush1.msra.mxu0 0.0
    %1085 = vmatprep.subr.mxu0 0.0
    %1086 = vmatpush1.msra.mxu0 0.0
    %1087 = vmatprep.subr.mxu0 0.0
    %1088 = vmatpush1.msra.mxu0 0.0
    %1089 = vmatprep.subr.mxu0 0.0
    %1090 = vmatpush1.msra.mxu0 0.0
    %1091 = vmatprep.subr.mxu0 0.0
    %1092 = vmatpush1.msra.mxu0 0.0
    %1093 = vmatprep.subr.mxu0 0.0
    %1094 = vmatpush1.msra.mxu0 0.0
    %1095 = vmatprep.subr.mxu0 0.0
    %1096 = vmatpush1.msra.mxu0 0.0
    %1097 = vmatprep.subr.mxu0 0.0
    %1098 = vmatpush1.msra.mxu0 0.0
    %1099 = vmatprep.subr.mxu0 0.0
    %1100 = vmatpush1.msra.mxu0 0.0
    %1101 = vmatprep.subr.mxu0 0.0
    %1102 = vmatpush1.msra.mxu0 0.0
    %1103 = vmatprep.subr.mxu0 0.0
    %1104 = vmatpush1.msra.mxu0 0.0
    %1105 = vmatprep.subr.mxu0 0.0
    %1106 = vmatpush1.msra.mxu0 0.0
    %1107 = vmatprep.subr.mxu0 0.0
    %1108 = vmatpush1.msra.mxu0 0.0
    %1109 = vmatprep.subr.mxu0 0.0
    %1110 = vmatpush1.msra.mxu0 0.0
    %1111 = vmatprep.subr.mxu0 0.0
    %1112 = vmatpush1.msra.mxu0 0.0
    %1113 = vmatprep.subr.mxu0 0.0
    %1114 = vmatpush1.msra.mxu0 0.0
    %1115 = vmatprep.subr.mxu0 0.0
    %1116 = vmatpush1.msra.mxu0 0.0
    %1117 = vmatprep.subr.mxu0 0.0
    %1118 = vmatpush1.msra.mxu0 0.0
    %1119 = vmatprep.subr.mxu0 0.0
    %1120 = vmatpush1.msra.mxu0 0.0
    %1121 = vmatprep.subr.mxu0 0.0
    %1122 = vmatpush1.msra.mxu0 0.0
    %1123 = vmatprep.subr.mxu0 0.0
    %1124 = vmatpush1.msra.mxu0 0.0
    %1125 = vmatprep.subr.mxu0 0.0
    %1126 = vmatpush1.msra.mxu0 0.0
    %1127 = vmatprep.subr.mxu0 0.0
    %1128 = vmatpush1.msra.mxu0 0.0
    %1129 = vmatprep.subr.mxu0 0.0
    %1130 = vmatpush1.msra.mxu0 0.0
    %1131 = vmatprep.subr.mxu0 0.0
    %1132 = vmatpush1.msra.mxu0 0.0
    %1133 = vmatprep.subr.mxu0 0.0
    %1134 = vmatpush1.msra.mxu0 0.0
    %1135 = vmatprep.mubr.f32.mxu0 0.0
    %1136 = vmatmul.mubr.f32.gmra.mrb[0].mxu0 %v1069
    %v1137 = vpop.f32.mrb[0].mxu0
    %v1138 = vadd.f32 0.0, %v1137
    %v1139 = vpop.f32.mrb[0].mxu0
    %1140 = vdwg.mxu0
    %v1142 = vlaneseq
    %v1143 = vshrl.u32 %v1142, 7
    %v1144 = vsub.s32 0, %v1143
    %v1145 = vrot.slane %v1066, %v1144
    %v1147 = vadd.f32 %v1145, %v1138
    %v1149 = vsel %vm205, %v1064, 0
    %1151 = vmatprep.subr.mxu0 0.0
    %1152 = vmatpush1.msra.mxu0 %v29
    %1153 = vmatprep.subr.mxu0 0.0
    %1154 = vmatpush1.msra.mxu0 %v30
    %1155 = vmatprep.subr.mxu0 0.0
    %1156 = vmatpush1.msra.mxu0 %v31
    %1157 = vmatprep.subr.mxu0 0.0
    %1158 = vmatpush1.msra.mxu0 %v32
    %1159 = vmatprep.subr.mxu0 0.0
    %1160 = vmatpush1.msra.mxu0 %v33
    %1161 = vmatprep.subr.mxu0 0.0
    %1162 = vmatpush1.msra.mxu0 %v34
    %1163 = vmatprep.subr.mxu0 0.0
    %1164 = vmatpush1.msra.mxu0 %v35
    %1165 = vmatprep.subr.mxu0 0.0
    %1166 = vmatpush1.msra.mxu0 %v36
    %1167 = vmatprep.subr.mxu0 0.0
    %1168 = vmatpush1.msra.mxu0 0.0
    %1169 = vmatprep.subr.mxu0 0.0
    %1170 = vmatpush1.msra.mxu0 0.0
    %1171 = vmatprep.subr.mxu0 0.0
    %1172 = vmatpush1.msra.mxu0 0.0
    %1173 = vmatprep.subr.mxu0 0.0
    %1174 = vmatpush1.msra.mxu0 0.0
    %1175 = vmatprep.subr.mxu0 0.0
    %1176 = vmatpush1.msra.mxu0 0.0
    %1177 = vmatprep.subr.mxu0 0.0
    %1178 = vmatpush1.msra.mxu0 0.0
    %1179 = vmatprep.subr.mxu0 0.0
    %1180 = vmatpush1.msra.mxu0 0.0
    %1181 = vmatprep.subr.mxu0 0.0
    %1182 = vmatpush1.msra.mxu0 0.0
    %1183 = vmatprep.subr.mxu0 0.0
    %1184 = vmatpush1.msra.mxu0 0.0
    %1185 = vmatprep.subr.mxu0 0.0
    %1186 = vmatpush1.msra.mxu0 0.0
    %1187 = vmatprep.subr.mxu0 0.0
    %1188 = vmatpush1.msra.mxu0 0.0
    %1189 = vmatprep.subr.mxu0 0.0
    %1190 = vmatpush1.msra.mxu0 0.0
    %1191 = vmatprep.subr.mxu0 0.0
    %1192 = vmatpush1.msra.mxu0 0.0
    %1193 = vmatprep.subr.mxu0 0.0
    %1194 = vmatpush1.msra.mxu0 0.0
    %1195 = vmatprep.subr.mxu0 0.0
    %1196 = vmatpush1.msra.mxu0 0.0
    %1197 = vmatprep.subr.mxu0 0.0
    %1198 = vmatpush1.msra.mxu0 0.0
    %1199 = vmatprep.subr.mxu0 0.0
    %1200 = vmatpush1.msra.mxu0 0.0
    %1201 = vmatprep.subr.mxu0 0.0
    %1202 = vmatpush1.msra.mxu0 0.0
    %1203 = vmatprep.subr.mxu0 0.0
    %1204 = vmatpush1.msra.mxu0 0.0
    %1205 = vmatprep.subr.mxu0 0.0
    %1206 = vmatpush1.msra.mxu0 0.0
    %1207 = vmatprep.subr.mxu0 0.0
    %1208 = vmatpush1.msra.mxu0 0.0
    %1209 = vmatprep.subr.mxu0 0.0
    %1210 = vmatpush1.msra.mxu0 0.0
    %1211 = vmatprep.subr.mxu0 0.0
    %1212 = vmatpush1.msra.mxu0 0.0
    %1213 = vmatprep.subr.mxu0 0.0
    %1214 = vmatpush1.msra.mxu0 0.0
    %1215 = vmatprep.mubr.f32.mxu0 0.0
    %1216 = vmatmul.mubr.f32.gmra.mrb[0].mxu0 %v1149
    %v1217 = vpop.f32.mrb[0].mxu0
    %v1218 = vadd.f32 %v1147, %v1217
    %v1219 = vpop.f32.mrb[0].mxu0
    %1220 = vdwg.mxu0
    %v1221 = vtanh.pop %v1218
    %s1222 = scalar_lea.vmem %s3, 8
    %v1223 = vld [vmem:[%s1222] sm:$0x1]
    %v1225 = vlaneseq
    %v1226 = vshrl.u32 %v1225, 7
    %v1227 = vsub.s32 0, %v1226
    %v1228 = vrot.slane %v1223, %v1227
    %v1231 = vsel %vm205, %v1221, 0
    %1233 = vmatprep.subr.mxu0 0.0
    %1234 = vmatpush1.msra.mxu0 %v29
    %1235 = vmatprep.subr.mxu0 0.0
    %1236 = vmatpush1.msra.mxu0 %v30
    %1237 = vmatprep.subr.mxu0 0.0
    %1238 = vmatpush1.msra.mxu0 %v31
    %1239 = vmatprep.subr.mxu0 0.0
    %1240 = vmatpush1.msra.mxu0 %v32
    %1241 = vmatprep.subr.mxu0 0.0
    %1242 = vmatpush1.msra.mxu0 %v33
    %1243 = vmatprep.subr.mxu0 0.0
    %1244 = vmatpush1.msra.mxu0 %v34
    %1245 = vmatprep.subr.mxu0 0.0
    %1246 = vmatpush1.msra.mxu0 %v35
    %1247 = vmatprep.subr.mxu0 0.0
    %1248 = vmatpush1.msra.mxu0 %v36
    %1249 = vmatprep.subr.mxu0 0.0
    %1250 = vmatpush1.msra.mxu0 0.0
    %1251 = vmatprep.subr.mxu0 0.0
    %1252 = vmatpush1.msra.mxu0 0.0
    %1253 = vmatprep.subr.mxu0 0.0
    %1254 = vmatpush1.msra.mxu0 0.0
    %1255 = vmatprep.subr.mxu0 0.0
    %1256 = vmatpush1.msra.mxu0 0.0
    %1257 = vmatprep.subr.mxu0 0.0
    %1258 = vmatpush1.msra.mxu0 0.0
    %1259 = vmatprep.subr.mxu0 0.0
    %1260 = vmatpush1.msra.mxu0 0.0
    %1261 = vmatprep.subr.mxu0 0.0
    %1262 = vmatpush1.msra.mxu0 0.0
    %1263 = vmatprep.subr.mxu0 0.0
    %1264 = vmatpush1.msra.mxu0 0.0
    %1265 = vmatprep.subr.mxu0 0.0
    %1266 = vmatpush1.msra.mxu0 0.0
    %1267 = vmatprep.subr.mxu0 0.0
    %1268 = vmatpush1.msra.mxu0 0.0
    %1269 = vmatprep.subr.mxu0 0.0
    %1270 = vmatpush1.msra.mxu0 0.0
    %1271 = vmatprep.subr.mxu0 0.0
    %1272 = vmatpush1.msra.mxu0 0.0
    %1273 = vmatprep.subr.mxu0 0.0
    %1274 = vmatpush1.msra.mxu0 0.0
    %1275 = vmatprep.subr.mxu0 0.0
    %1276 = vmatpush1.msra.mxu0 0.0
    %1277 = vmatprep.subr.mxu0 0.0
    %1278 = vmatpush1.msra.mxu0 0.0
    %1279 = vmatprep.subr.mxu0 0.0
    %1280 = vmatpush1.msra.mxu0 0.0
    %1281 = vmatprep.subr.mxu0 0.0
    %1282 = vmatpush1.msra.mxu0 0.0
    %1283 = vmatprep.subr.mxu0 0.0
    %1284 = vmatpush1.msra.mxu0 0.0
    %1285 = vmatprep.subr.mxu0 0.0
    %1286 = vmatpush1.msra.mxu0 0.0
    %1287 = vmatprep.subr.mxu0 0.0
    %1288 = vmatpush1.msra.mxu0 0.0
    %1289 = vmatprep.subr.mxu0 0.0
    %1290 = vmatpush1.msra.mxu0 0.0
    %1291 = vmatprep.subr.mxu0 0.0
    %1292 = vmatpush1.msra.mxu0 0.0
    %1293 = vmatprep.subr.mxu0 0.0
    %1294 = vmatpush1.msra.mxu0 0.0
    %1295 = vmatprep.subr.mxu0 0.0
    %1296 = vmatpush1.msra.mxu0 0.0
    %1297 = vmatprep.mubr.f32.mxu0 0.0
    %1298 = vmatmul.mubr.f32.gmra.mrb[0].mxu0 %v1231
    %v1299 = vpop.f32.mrb[0].mxu0
    %v1300 = vadd.f32 %v1228, %v1299
    %v1301 = vpop.f32.mrb[0].mxu0
    %1302 = vdwg.mxu0
    %v1303 = vtanh.pop %v1300
    %s1304 = scalar_lea.vmem %s3, 9
    %v1305 = vld [vmem:[%s1304] sm:$0x1]
    %v1307 = vlaneseq
    %v1308 = vshrl.u32 %v1307, 7
    %v1309 = vsub.s32 0, %v1308
    %v1310 = vrot.slane %v1305, %v1309
    %v1313 = vsel %vm205, %v1303, 0
    %1315 = vmatprep.subr.mxu0 0.0
    %1316 = vmatpush1.msra.mxu0 %v29
    %1317 = vmatprep.subr.mxu0 0.0
    %1318 = vmatpush1.msra.mxu0 %v30
    %1319 = vmatprep.subr.mxu0 0.0
    %1320 = vmatpush1.msra.mxu0 %v31
    %1321 = vmatprep.subr.mxu0 0.0
    %1322 = vmatpush1.msra.mxu0 %v32
    %1323 = vmatprep.subr.mxu0 0.0
    %1324 = vmatpush1.msra.mxu0 %v33
    %1325 = vmatprep.subr.mxu0 0.0
    %1326 = vmatpush1.msra.mxu0 %v34
    %1327 = vmatprep.subr.mxu0 0.0
    %1328 = vmatpush1.msra.mxu0 %v35
    %1329 = vmatprep.subr.mxu0 0.0
    %1330 = vmatpush1.msra.mxu0 %v36
    %1331 = vmatprep.subr.mxu0 0.0
    %1332 = vmatpush1.msra.mxu0 0.0
    %1333 = vmatprep.subr.mxu0 0.0
    %1334 = vmatpush1.msra.mxu0 0.0
    %1335 = vmatprep.subr.mxu0 0.0
    %1336 = vmatpush1.msra.mxu0 0.0
    %1337 = vmatprep.subr.mxu0 0.0
    %1338 = vmatpush1.msra.mxu0 0.0
    %1339 = vmatprep.subr.mxu0 0.0
    %1340 = vmatpush1.msra.mxu0 0.0
    %1341 = vmatprep.subr.mxu0 0.0
    %1342 = vmatpush1.msra.mxu0 0.0
    %1343 = vmatprep.subr.mxu0 0.0
    %1344 = vmatpush1.msra.mxu0 0.0
    %1345 = vmatprep.subr.mxu0 0.0
    %1346 = vmatpush1.msra.mxu0 0.0
    %1347 = vmatprep.subr.mxu0 0.0
    %1348 = vmatpush1.msra.mxu0 0.0
    %1349 = vmatprep.subr.mxu0 0.0
    %1350 = vmatpush1.msra.mxu0 0.0
    %1351 = vmatprep.subr.mxu0 0.0
    %1352 = vmatpush1.msra.mxu0 0.0
    %1353 = vmatprep.subr.mxu0 0.0
    %1354 = vmatpush1.msra.mxu0 0.0
    %1355 = vmatprep.subr.mxu0 0.0
    %1356 = vmatpush1.msra.mxu0 0.0
    %1357 = vmatprep.subr.mxu0 0.0
    %1358 = vmatpush1.msra.mxu0 0.0
    %1359 = vmatprep.subr.mxu0 0.0
    %1360 = vmatpush1.msra.mxu0 0.0
    %1361 = vmatprep.subr.mxu0 0.0
    %1362 = vmatpush1.msra.mxu0 0.0
    %1363 = vmatprep.subr.mxu0 0.0
    %1364 = vmatpush1.msra.mxu0 0.0
    %1365 = vmatprep.subr.mxu0 0.0
    %1366 = vmatpush1.msra.mxu0 0.0
    %1367 = vmatprep.subr.mxu0 0.0
    %1368 = vmatpush1.msra.mxu0 0.0
    %1369 = vmatprep.subr.mxu0 0.0
    %1370 = vmatpush1.msra.mxu0 0.0
    %1371 = vmatprep.subr.mxu0 0.0
    %1372 = vmatpush1.msra.mxu0 0.0
    %1373 = vmatprep.subr.mxu0 0.0
    %1374 = vmatpush1.msra.mxu0 0.0
    %1375 = vmatprep.subr.mxu0 0.0
    %1376 = vmatpush1.msra.mxu0 0.0
    %1377 = vmatprep.subr.mxu0 0.0
    %1378 = vmatpush1.msra.mxu0 0.0
    %1379 = vmatprep.mubr.f32.mxu0 0.0
    %1380 = vmatmul.mubr.f32.gmra.mrb[0].mxu0 %v1313
    %v1381 = vpop.f32.mrb[0].mxu0
    %v1382 = vadd.f32 %v1310, %v1381
    %v1383 = vpop.f32.mrb[0].mxu0
    %1384 = vdwg.mxu0
    %v1385 = vtanh.pop %v1382
    %s1386 = scalar_lea.vmem %s3, 10
    %v1387 = vld [vmem:[%s1386] sm:$0x1]
    %v1389 = vlaneseq
    %v1390 = vshrl.u32 %v1389, 7
    %v1391 = vsub.s32 0, %v1390
    %v1392 = vrot.slane %v1387, %v1391
    %v1395 = vsel %vm205, %v1385, 0
    %1397 = vmatprep.subr.mxu0 0.0
    %1398 = vmatpush1.msra.mxu0 %v29
    %1399 = vmatprep.subr.mxu0 0.0
    %1400 = vmatpush1.msra.mxu0 %v30
    %1401 = vmatprep.subr.mxu0 0.0
    %1402 = vmatpush1.msra.mxu0 %v31
    %1403 = vmatprep.subr.mxu0 0.0
    %1404 = vmatpush1.msra.mxu0 %v32
    %1405 = vmatprep.subr.mxu0 0.0
    %1406 = vmatpush1.msra.mxu0 %v33
    %1407 = vmatprep.subr.mxu0 0.0
    %1408 = vmatpush1.msra.mxu0 %v34
    %1409 = vmatprep.subr.mxu0 0.0
    %1410 = vmatpush1.msra.mxu0 %v35
    %1411 = vmatprep.subr.mxu0 0.0
    %1412 = vmatpush1.msra.mxu0 %v36
    %1413 = vmatprep.subr.mxu0 0.0
    %1414 = vmatpush1.msra.mxu0 0.0
    %1415 = vmatprep.subr.mxu0 0.0
    %1416 = vmatpush1.msra.mxu0 0.0
    %1417 = vmatprep.subr.mxu0 0.0
    %1418 = vmatpush1.msra.mxu0 0.0
    %1419 = vmatprep.subr.mxu0 0.0
    %1420 = vmatpush1.msra.mxu0 0.0
    %1421 = vmatprep.subr.mxu0 0.0
    %1422 = vmatpush1.msra.mxu0 0.0
    %1423 = vmatprep.subr.mxu0 0.0
    %1424 = vmatpush1.msra.mxu0 0.0
    %1425 = vmatprep.subr.mxu0 0.0
    %1426 = vmatpush1.msra.mxu0 0.0
    %1427 = vmatprep.subr.mxu0 0.0
    %1428 = vmatpush1.msra.mxu0 0.0
    %1429 = vmatprep.subr.mxu0 0.0
    %1430 = vmatpush1.msra.mxu0 0.0
    %1431 = vmatprep.subr.mxu0 0.0
    %1432 = vmatpush1.msra.mxu0 0.0
    %1433 = vmatprep.subr.mxu0 0.0
    %1434 = vmatpush1.msra.mxu0 0.0
    %1435 = vmatprep.subr.mxu0 0.0
    %1436 = vmatpush1.msra.mxu0 0.0
    %1437 = vmatprep.subr.mxu0 0.0
    %1438 = vmatpush1.msra.mxu0 0.0
    %1439 = vmatprep.subr.mxu0 0.0
    %1440 = vmatpush1.msra.mxu0 0.0
    %1441 = vmatprep.subr.mxu0 0.0
    %1442 = vmatpush1.msra.mxu0 0.0
    %1443 = vmatprep.subr.mxu0 0.0
    %1444 = vmatpush1.msra.mxu0 0.0
    %1445 = vmatprep.subr.mxu0 0.0
    %1446 = vmatpush1.msra.mxu0 0.0
    %1447 = vmatprep.subr.mxu0 0.0
    %1448 = vmatpush1.msra.mxu0 0.0
    %1449 = vmatprep.subr.mxu0 0.0
    %1450 = vmatpush1.msra.mxu0 0.0
    %1451 = vmatprep.subr.mxu0 0.0
    %1452 = vmatpush1.msra.mxu0 0.0
    %1453 = vmatprep.subr.mxu0 0.0
    %1454 = vmatpush1.msra.mxu0 0.0
    %1455 = vmatprep.subr.mxu0 0.0
    %1456 = vmatpush1.msra.mxu0 0.0
    %1457 = vmatprep.subr.mxu0 0.0
    %1458 = vmatpush1.msra.mxu0 0.0
    %1459 = vmatprep.subr.mxu0 0.0
    %1460 = vmatpush1.msra.mxu0 0.0
    %1461 = vmatprep.mubr.f32.mxu0 0.0
    %1462 = vmatmul.mubr.f32.gmra.mrb[0].mxu0 %v1395
    %v1463 = vpop.f32.mrb[0].mxu0
    %v1464 = vadd.f32 %v1392, %v1463
    %v1465 = vpop.f32.mrb[0].mxu0
    %1466 = vdwg.mxu0
    %v1467 = vtanh.pop %v1464
    %s1468 = scalar_lea.vmem %s3, 11
    %v1469 = vld [vmem:[%s1468] sm:$0x1]
    %v1471 = vlaneseq
    %v1472 = vshrl.u32 %v1471, 7
    %v1473 = vsub.s32 0, %v1472
    %v1474 = vrot.slane %v1469, %v1473
    %v1477 = vsel %vm205, %v1467, 0
    %1479 = vmatprep.subr.mxu0 0.0
    %1480 = vmatpush1.msra.mxu0 %v29
    %1481 = vmatprep.subr.mxu0 0.0
    %1482 = vmatpush1.msra.mxu0 %v30
    %1483 = vmatprep.subr.mxu0 0.0
    %1484 = vmatpush1.msra.mxu0 %v31
    %1485 = vmatprep.subr.mxu0 0.0
    %1486 = vmatpush1.msra.mxu0 %v32
    %1487 = vmatprep.subr.mxu0 0.0
    %1488 = vmatpush1.msra.mxu0 %v33
    %1489 = vmatprep.subr.mxu0 0.0
    %1490 = vmatpush1.msra.mxu0 %v34
    %1491 = vmatprep.subr.mxu0 0.0
    %1492 = vmatpush1.msra.mxu0 %v35
    %1493 = vmatprep.subr.mxu0 0.0
    %1494 = vmatpush1.msra.mxu0 %v36
    %1495 = vmatprep.subr.mxu0 0.0
    %1496 = vmatpush1.msra.mxu0 0.0
    %1497 = vmatprep.subr.mxu0 0.0
    %1498 = vmatpush1.msra.mxu0 0.0
    %1499 = vmatprep.subr.mxu0 0.0
    %1500 = vmatpush1.msra.mxu0 0.0
    %1501 = vmatprep.subr.mxu0 0.0
    %1502 = vmatpush1.msra.mxu0 0.0
    %1503 = vmatprep.subr.mxu0 0.0
    %1504 = vmatpush1.msra.mxu0 0.0
    %1505 = vmatprep.subr.mxu0 0.0
    %1506 = vmatpush1.msra.mxu0 0.0
    %1507 = vmatprep.subr.mxu0 0.0
    %1508 = vmatpush1.msra.mxu0 0.0
    %1509 = vmatprep.subr.mxu0 0.0
    %1510 = vmatpush1.msra.mxu0 0.0
    %1511 = vmatprep.subr.mxu0 0.0
    %1512 = vmatpush1.msra.mxu0 0.0
    %1513 = vmatprep.subr.mxu0 0.0
    %1514 = vmatpush1.msra.mxu0 0.0
    %1515 = vmatprep.subr.mxu0 0.0
    %1516 = vmatpush1.msra.mxu0 0.0
    %1517 = vmatprep.subr.mxu0 0.0
    %1518 = vmatpush1.msra.mxu0 0.0
    %1519 = vmatprep.subr.mxu0 0.0
    %1520 = vmatpush1.msra.mxu0 0.0
    %1521 = vmatprep.subr.mxu0 0.0
    %1522 = vmatpush1.msra.mxu0 0.0
    %1523 = vmatprep.subr.mxu0 0.0
    %1524 = vmatpush1.msra.mxu0 0.0
    %1525 = vmatprep.subr.mxu0 0.0
    %1526 = vmatpush1.msra.mxu0 0.0
    %1527 = vmatprep.subr.mxu0 0.0
    %1528 = vmatpush1.msra.mxu0 0.0
    %1529 = vmatprep.subr.mxu0 0.0
    %1530 = vmatpush1.msra.mxu0 0.0
    %1531 = vmatprep.subr.mxu0 0.0
    %1532 = vmatpush1.msra.mxu0 0.0
    %1533 = vmatprep.subr.mxu0 0.0
    %1534 = vmatpush1.msra.mxu0 0.0
    %1535 = vmatprep.subr.mxu0 0.0
    %1536 = vmatpush1.msra.mxu0 0.0
    %1537 = vmatprep.subr.mxu0 0.0
    %1538 = vmatpush1.msra.mxu0 0.0
    %1539 = vmatprep.subr.mxu0 0.0
    %1540 = vmatpush1.msra.mxu0 0.0
    %1541 = vmatprep.subr.mxu0 0.0
    %1542 = vmatpush1.msra.mxu0 0.0
    %1543 = vmatprep.mubr.f32.mxu0 0.0
    %1544 = vmatmul.mubr.f32.gmra.mrb[0].mxu0 %v1477
    %v1545 = vpop.f32.mrb[0].mxu0
    %v1546 = vadd.f32 %v1474, %v1545
    %v1547 = vpop.f32.mrb[0].mxu0
    %1548 = vdwg.mxu0
    %v1549 = vtanh.pop %v1546
    %s1550 = scalar_lea.vmem %s3, 12
    %v1551 = vld [vmem:[%s1550] sm:$0x1]
    %v1553 = vlaneseq
    %v1554 = vshrl.u32 %v1553, 7
    %v1555 = vsub.s32 0, %v1554
    %v1556 = vrot.slane %v1551, %v1555
    %v1559 = vsel %vm205, %v1549, 0
    %1561 = vmatprep.subr.mxu0 0.0
    %1562 = vmatpush1.msra.mxu0 %v29
    %1563 = vmatprep.subr.mxu0 0.0
    %1564 = vmatpush1.msra.mxu0 %v30
    %1565 = vmatprep.subr.mxu0 0.0
    %1566 = vmatpush1.msra.mxu0 %v31
    %1567 = vmatprep.subr.mxu0 0.0
    %1568 = vmatpush1.msra.mxu0 %v32
    %1569 = vmatprep.subr.mxu0 0.0
    %1570 = vmatpush1.msra.mxu0 %v33
    %1571 = vmatprep.subr.mxu0 0.0
    %1572 = vmatpush1.msra.mxu0 %v34
    %1573 = vmatprep.subr.mxu0 0.0
    %1574 = vmatpush1.msra.mxu0 %v35
    %1575 = vmatprep.subr.mxu0 0.0
    %1576 = vmatpush1.msra.mxu0 %v36
    %1577 = vmatprep.subr.mxu0 0.0
    %1578 = vmatpush1.msra.mxu0 0.0
    %1579 = vmatprep.subr.mxu0 0.0
    %1580 = vmatpush1.msra.mxu0 0.0
    %1581 = vmatprep.subr.mxu0 0.0
    %1582 = vmatpush1.msra.mxu0 0.0
    %1583 = vmatprep.subr.mxu0 0.0
    %1584 = vmatpush1.msra.mxu0 0.0
    %1585 = vmatprep.subr.mxu0 0.0
    %1586 = vmatpush1.msra.mxu0 0.0
    %1587 = vmatprep.subr.mxu0 0.0
    %1588 = vmatpush1.msra.mxu0 0.0
    %1589 = vmatprep.subr.mxu0 0.0
    %1590 = vmatpush1.msra.mxu0 0.0
    %1591 = vmatprep.subr.mxu0 0.0
    %1592 = vmatpush1.msra.mxu0 0.0
    %1593 = vmatprep.subr.mxu0 0.0
    %1594 = vmatpush1.msra.mxu0 0.0
    %1595 = vmatprep.subr.mxu0 0.0
    %1596 = vmatpush1.msra.mxu0 0.0
    %1597 = vmatprep.subr.mxu0 0.0
    %1598 = vmatpush1.msra.mxu0 0.0
    %1599 = vmatprep.subr.mxu0 0.0
    %1600 = vmatpush1.msra.mxu0 0.0
    %1601 = vmatprep.subr.mxu0 0.0
    %1602 = vmatpush1.msra.mxu0 0.0
    %1603 = vmatprep.subr.mxu0 0.0
    %1604 = vmatpush1.msra.mxu0 0.0
    %1605 = vmatprep.subr.mxu0 0.0
    %1606 = vmatpush1.msra.mxu0 0.0
    %1607 = vmatprep.subr.mxu0 0.0
    %1608 = vmatpush1.msra.mxu0 0.0
    %1609 = vmatprep.subr.mxu0 0.0
    %1610 = vmatpush1.msra.mxu0 0.0
    %1611 = vmatprep.subr.mxu0 0.0
    %1612 = vmatpush1.msra.mxu0 0.0
    %1613 = vmatprep.subr.mxu0 0.0
    %1614 = vmatpush1.msra.mxu0 0.0
    %1615 = vmatprep.subr.mxu0 0.0
    %1616 = vmatpush1.msra.mxu0 0.0
    %1617 = vmatprep.subr.mxu0 0.0
    %1618 = vmatpush1.msra.mxu0 0.0
    %1619 = vmatprep.subr.mxu0 0.0
    %1620 = vmatpush1.msra.mxu0 0.0
    %1621 = vmatprep.subr.mxu0 0.0
    %1622 = vmatpush1.msra.mxu0 0.0
    %1623 = vmatprep.subr.mxu0 0.0
    %1624 = vmatpush1.msra.mxu0 0.0
    %1625 = vmatprep.mubr.f32.mxu0 0.0
    %1626 = vmatmul.mubr.f32.gmra.mrb[0].mxu0 %v1559
    %v1627 = vpop.f32.mrb[0].mxu0
    %v1628 = vadd.f32 %v1556, %v1627
    %v1629 = vpop.f32.mrb[0].mxu0
    %1630 = vdwg.mxu0
    %v1631 = vtanh.pop %v1628
    %s1632 = scalar_lea.vmem %s3, 13
    %v1633 = vld [vmem:[%s1632] sm:$0x1]
    %v1635 = vlaneseq
    %v1636 = vshrl.u32 %v1635, 7
    %v1637 = vsub.s32 0, %v1636
    %v1638 = vrot.slane %v1633, %v1637
    %v1641 = vsel %vm205, %v1631, 0
    %1643 = vmatprep.subr.mxu0 0.0
    %1644 = vmatpush1.msra.mxu0 %v29
    %1645 = vmatprep.subr.mxu0 0.0
    %1646 = vmatpush1.msra.mxu0 %v30
    %1647 = vmatprep.subr.mxu0 0.0
    %1648 = vmatpush1.msra.mxu0 %v31
    %1649 = vmatprep.subr.mxu0 0.0
    %1650 = vmatpush1.msra.mxu0 %v32
    %1651 = vmatprep.subr.mxu0 0.0
    %1652 = vmatpush1.msra.mxu0 %v33
    %1653 = vmatprep.subr.mxu0 0.0
    %1654 = vmatpush1.msra.mxu0 %v34
    %1655 = vmatprep.subr.mxu0 0.0
    %1656 = vmatpush1.msra.mxu0 %v35
    %1657 = vmatprep.subr.mxu0 0.0
    %1658 = vmatpush1.msra.mxu0 %v36
    %1659 = vmatprep.subr.mxu0 0.0
    %1660 = vmatpush1.msra.mxu0 0.0
    %1661 = vmatprep.subr.mxu0 0.0
    %1662 = vmatpush1.msra.mxu0 0.0
    %1663 = vmatprep.subr.mxu0 0.0
    %1664 = vmatpush1.msra.mxu0 0.0
    %1665 = vmatprep.subr.mxu0 0.0
    %1666 = vmatpush1.msra.mxu0 0.0
    %1667 = vmatprep.subr.mxu0 0.0
    %1668 = vmatpush1.msra.mxu0 0.0
    %1669 = vmatprep.subr.mxu0 0.0
    %1670 = vmatpush1.msra.mxu0 0.0
    %1671 = vmatprep.subr.mxu0 0.0
    %1672 = vmatpush1.msra.mxu0 0.0
    %1673 = vmatprep.subr.mxu0 0.0
    %1674 = vmatpush1.msra.mxu0 0.0
    %1675 = vmatprep.subr.mxu0 0.0
    %1676 = vmatpush1.msra.mxu0 0.0
    %1677 = vmatprep.subr.mxu0 0.0
    %1678 = vmatpush1.msra.mxu0 0.0
    %1679 = vmatprep.subr.mxu0 0.0
    %1680 = vmatpush1.msra.mxu0 0.0
    %1681 = vmatprep.subr.mxu0 0.0
    %1682 = vmatpush1.msra.mxu0 0.0
    %1683 = vmatprep.subr.mxu0 0.0
    %1684 = vmatpush1.msra.mxu0 0.0
    %1685 = vmatprep.subr.mxu0 0.0
    %1686 = vmatpush1.msra.mxu0 0.0
    %1687 = vmatprep.subr.mxu0 0.0
    %1688 = vmatpush1.msra.mxu0 0.0
    %1689 = vmatprep.subr.mxu0 0.0
    %1690 = vmatpush1.msra.mxu0 0.0
    %1691 = vmatprep.subr.mxu0 0.0
    %1692 = vmatpush1.msra.mxu0 0.0
    %1693 = vmatprep.subr.mxu0 0.0
    %1694 = vmatpush1.msra.mxu0 0.0
    %1695 = vmatprep.subr.mxu0 0.0
    %1696 = vmatpush1.msra.mxu0 0.0
    %1697 = vmatprep.subr.mxu0 0.0
    %1698 = vmatpush1.msra.mxu0 0.0
    %1699 = vmatprep.subr.mxu0 0.0
    %1700 = vmatpush1.msra.mxu0 0.0
    %1701 = vmatprep.subr.mxu0 0.0
    %1702 = vmatpush1.msra.mxu0 0.0
    %1703 = vmatprep.subr.mxu0 0.0
    %1704 = vmatpush1.msra.mxu0 0.0
    %1705 = vmatprep.subr.mxu0 0.0
    %1706 = vmatpush1.msra.mxu0 0.0
    %1707 = vmatprep.mubr.f32.mxu0 0.0
    %1708 = vmatmul.mubr.f32.gmra.mrb[0].mxu0 %v1641
    %v1709 = vpop.f32.mrb[0].mxu0
    %v1710 = vadd.f32 %v1638, %v1709
    %v1711 = vpop.f32.mrb[0].mxu0
    %1712 = vdwg.mxu0
    %v1713 = vtanh.pop %v1710
    %s1714 = scalar_lea.vmem %s3, 14
    %v1715 = vld [vmem:[%s1714] sm:$0x1]
    %v1717 = vlaneseq
    %v1718 = vshrl.u32 %v1717, 7
    %v1719 = vsub.s32 0, %v1718
    %v1720 = vrot.slane %v1715, %v1719
    %v1723 = vsel %vm205, %v1713, 0
    %1725 = vmatprep.subr.mxu0 0.0
    %1726 = vmatpush1.msra.mxu0 %v29
    %1727 = vmatprep.subr.mxu0 0.0
    %1728 = vmatpush1.msra.mxu0 %v30
    %1729 = vmatprep.subr.mxu0 0.0
    %1730 = vmatpush1.msra.mxu0 %v31
    %1731 = vmatprep.subr.mxu0 0.0
    %1732 = vmatpush1.msra.mxu0 %v32
    %1733 = vmatprep.subr.mxu0 0.0
    %1734 = vmatpush1.msra.mxu0 %v33
    %1735 = vmatprep.subr.mxu0 0.0
    %1736 = vmatpush1.msra.mxu0 %v34
    %1737 = vmatprep.subr.mxu0 0.0
    %1738 = vmatpush1.msra.mxu0 %v35
    %1739 = vmatprep.subr.mxu0 0.0
    %1740 = vmatpush1.msra.mxu0 %v36
    %1741 = vmatprep.subr.mxu0 0.0
    %1742 = vmatpush1.msra.mxu0 0.0
    %1743 = vmatprep.subr.mxu0 0.0
    %1744 = vmatpush1.msra.mxu0 0.0
    %1745 = vmatprep.subr.mxu0 0.0
    %1746 = vmatpush1.msra.mxu0 0.0
    %1747 = vmatprep.subr.mxu0 0.0
    %1748 = vmatpush1.msra.mxu0 0.0
    %1749 = vmatprep.subr.mxu0 0.0
    %1750 = vmatpush1.msra.mxu0 0.0
    %1751 = vmatprep.subr.mxu0 0.0
    %1752 = vmatpush1.msra.mxu0 0.0
    %1753 = vmatprep.subr.mxu0 0.0
    %1754 = vmatpush1.msra.mxu0 0.0
    %1755 = vmatprep.subr.mxu0 0.0
    %1756 = vmatpush1.msra.mxu0 0.0
    %1757 = vmatprep.subr.mxu0 0.0
    %1758 = vmatpush1.msra.mxu0 0.0
    %1759 = vmatprep.subr.mxu0 0.0
    %1760 = vmatpush1.msra.mxu0 0.0
    %1761 = vmatprep.subr.mxu0 0.0
    %1762 = vmatpush1.msra.mxu0 0.0
    %1763 = vmatprep.subr.mxu0 0.0
    %1764 = vmatpush1.msra.mxu0 0.0
    %1765 = vmatprep.subr.mxu0 0.0
    %1766 = vmatpush1.msra.mxu0 0.0
    %1767 = vmatprep.subr.mxu0 0.0
    %1768 = vmatpush1.msra.mxu0 0.0
    %1769 = vmatprep.subr.mxu0 0.0
    %1770 = vmatpush1.msra.mxu0 0.0
    %1771 = vmatprep.subr.mxu0 0.0
    %1772 = vmatpush1.msra.mxu0 0.0
    %1773 = vmatprep.subr.mxu0 0.0
    %1774 = vmatpush1.msra.mxu0 0.0
    %1775 = vmatprep.subr.mxu0 0.0
    %1776 = vmatpush1.msra.mxu0 0.0
    %1777 = vmatprep.subr.mxu0 0.0
    %1778 = vmatpush1.msra.mxu0 0.0
    %1779 = vmatprep.subr.mxu0 0.0
    %1780 = vmatpush1.msra.mxu0 0.0
    %1781 = vmatprep.subr.mxu0 0.0
    %1782 = vmatpush1.msra.mxu0 0.0
    %1783 = vmatprep.subr.mxu0 0.0
    %1784 = vmatpush1.msra.mxu0 0.0
    %1785 = vmatprep.subr.mxu0 0.0
    %1786 = vmatpush1.msra.mxu0 0.0
    %1787 = vmatprep.subr.mxu0 0.0
    %1788 = vmatpush1.msra.mxu0 0.0
    %1789 = vmatprep.mubr.f32.mxu0 0.0
    %1790 = vmatmul.mubr.f32.gmra.mrb[0].mxu0 %v1723
    %v1791 = vpop.f32.mrb[0].mxu0
    %v1792 = vadd.f32 %v1720, %v1791
    %v1793 = vpop.f32.mrb[0].mxu0
    %1794 = vdwg.mxu0
    %v1795 = vtanh.pop %v1792
    %1797 = vrot.lane.b32.xlu0 %v1795, 72
    %v1798 = vpop.permute.xlu0 %1797
    %1800 = vst.msk [vmem:[%s4] sm:$0xff] %vm40, %v1798
    // Predicated region
    $region22: #{model_forward.1} parent=1 // pred_check
      _
    $region23: #{model_forward.1} parent=1 // pred_check_branch
      %1802 = sbr.rel (0) target = $region25
    $region24: #{model_forward.1} parent=1 // pred_region
      _
    $region25: #{model_forward.1} parent=1 // pred_fallthru
      _
    // Predicated region
    $region26: #{model_forward.1} parent=1 // pred_check
      _
    $region27: #{model_forward.1} parent=1 // pred_check_branch
      %1804 = sbr.rel (0) target = $region29
    $region28: #{model_forward.1} parent=1 // pred_region
      _
    $region29: #{model_forward.1} parent=1 // pred_fallthru
      _
    %1805 = vsyncpa [#allocation3], 1

</llo_original>
